<compile_context>
chip_gen: v7x
topology: tpu7x:2x2x1
jax: 0.10.0
libtpu: 0.0.40
codegen_flags: <defaults>
</compile_context>

<pallas_src>
import functools

import jax
import jax.numpy as jnp
from jax.experimental import pallas as pl
from jax.experimental.pallas import tpu as pltpu


_VMEM_LIMIT = 48 * 1024 * 1024  # > v5e 16 MiB scoped default, < v7x 64 MiB physical


def _round_up(v, m):
    return (v + m - 1) // m * m


def _masked_log_softmax(z, num_valid):
    # log_softmax over the first num_valid (real) class lanes; padded lanes
    # are pushed to -1e30 so exp() underflows to 0 and they never contribute.
    lane = jax.lax.broadcasted_iota(jnp.int32, z.shape, 1)
    z = jnp.where(lane < num_valid, z, jnp.float32(-1e30))
    m = jnp.max(z, axis=1, keepdims=True)
    s = z - m
    lse = jnp.log(jnp.sum(jnp.exp(s), axis=1, keepdims=True))
    return s - lse


# ----------------------------------------------------------------------------
# Fused small-graph kernel: A resident in VMEM, whole forward in one call.
# ----------------------------------------------------------------------------
def _fused_kernel(a_ref, x_ref, w1_ref, b1_ref, w2_ref, b2_ref, o_ref, *, num_valid):
    xw = jnp.dot(x_ref[...], w1_ref[...],
                 preferred_element_type=jnp.float32).astype(jnp.bfloat16)
    h = jnp.maximum(
        jnp.dot(a_ref[...], xw, preferred_element_type=jnp.float32) + b1_ref[...],
        0.0).astype(jnp.bfloat16)
    # (dropout: identity in eval mode)
    hw = jnp.dot(h, w2_ref[...],
                 preferred_element_type=jnp.float32).astype(jnp.bfloat16)
    z = jnp.dot(a_ref[...], hw, preferred_element_type=jnp.float32) + b2_ref[...]
    o_ref[...] = _masked_log_softmax(z, num_valid)


def _fused_forward(a, x, w1, b1, w2, b2, *, num_valid):
    n_pad = a.shape[0]
    f = x.shape[1]
    hp = w1.shape[1]
    cp = w2.shape[1]
    flops = (2 * n_pad * f * hp + 2 * n_pad * n_pad * hp
             + 2 * n_pad * hp * cp + 2 * n_pad * n_pad * cp)
    bytes_accessed = (a.size * 2 + x.size * 2 + n_pad * cp * 4
                      + w1.size * 2 + w2.size * 2 + (hp + cp) * 4)
    return pl.pallas_call(
        functools.partial(_fused_kernel, num_valid=num_valid),
        out_shape=jax.ShapeDtypeStruct((n_pad, cp), jnp.float32),
        grid=(1,),
        in_specs=[
            pl.BlockSpec((n_pad, n_pad), lambda i: (0, 0)),  # A (bf16, resident)
            pl.BlockSpec((n_pad, f), lambda i: (0, 0)),      # X (bf16)
            pl.BlockSpec((f, hp), lambda i: (0, 0)),         # W1
            pl.BlockSpec((1, hp), lambda i: (0, 0)),         # b1
            pl.BlockSpec((hp, cp), lambda i: (0, 0)),        # W2
            pl.BlockSpec((1, cp), lambda i: (0, 0)),         # b2
        ],
        out_specs=pl.BlockSpec((n_pad, cp), lambda i: (0, 0)),
        compiler_params=pltpu.CompilerParams(
            dimension_semantics=("arbitrary",),
            vmem_limit_bytes=_VMEM_LIMIT,
        ),
        cost_estimate=pl.CostEstimate(
            flops=flops, transcendentals=n_pad * cp, bytes_accessed=bytes_accessed),
    )(a, x, w1, b1, w2, b2)


# ----------------------------------------------------------------------------
# Tiled layer 1: HW = relu(A @ (X @ W1) + b1) @ W2   (H never hits HBM)
# ----------------------------------------------------------------------------
def _agg1_kernel(a_ref, x_ref, w1_ref, b1_ref, w2_ref, o_ref, acc_ref):
    k = pl.program_id(1)

    @pl.when(k == 0)
    def _():
        acc_ref[...] = jnp.zeros_like(acc_ref)

    # Recompute XW for this k-tile; F << hidden so the extra flops are
    # negligible vs. streaming a (tk, hidden) XW block from HBM.
    xw = jnp.dot(x_ref[...], w1_ref[...],
                 preferred_element_type=jnp.float32).astype(jnp.bfloat16)
    acc_ref[...] += jnp.dot(a_ref[...], xw, preferred_element_type=jnp.float32)

    @pl.when(k == pl.num_programs(1) - 1)
    def _():
        h = jnp.maximum(acc_ref[...] + b1_ref[...], 0.0).astype(jnp.bfloat16)
        # (dropout: identity in eval mode)
        o_ref[...] = jnp.dot(h, w2_ref[...],
                             preferred_element_type=jnp.float32).astype(o_ref.dtype)


def _agg_layer1(a, x, w1, b1, w2, *, tm, tk):
    n_pad = a.shape[0]
    f = x.shape[1]
    hp = w1.shape[1]
    cp = w2.shape[1]
    grid_i = n_pad // tm
    grid_k = n_pad // tk
    flops = (2 * n_pad * n_pad * hp                 # A @ XW
             + grid_i * 2 * n_pad * f * hp          # XW recomputed per row tile
             + 2 * n_pad * hp * cp)                 # finalize @ W2
    bytes_accessed = (a.size * 2                    # A streamed once
                      + grid_i * x.size * 2         # X re-streamed per row tile
                      + n_pad * cp * 2              # HW output (bf16)
                      + w1.size * 2 + w2.size * 2 + hp * 4)
    return pl.pallas_call(
        _agg1_kernel,
        out_shape=jax.ShapeDtypeStruct((n_pad, cp), jnp.bfloat16),
        grid=(grid_i, grid_k),
        in_specs=[
            pl.BlockSpec((tm, tk), lambda i, k: (i, k)),   # A tile
            pl.BlockSpec((tk, f), lambda i, k: (k, 0)),    # raw X tile (bf16)
            pl.BlockSpec((f, hp), lambda i, k: (0, 0)),    # W1 resident
            pl.BlockSpec((1, hp), lambda i, k: (0, 0)),    # b1 resident
            pl.BlockSpec((hp, cp), lambda i, k: (0, 0)),   # W2 resident
        ],
        out_specs=pl.BlockSpec((tm, cp), lambda i, k: (i, 0)),
        scratch_shapes=[pltpu.VMEM((tm, hp), jnp.float32)],
        compiler_params=pltpu.CompilerParams(
            dimension_semantics=("parallel", "arbitrary"),
            vmem_limit_bytes=_VMEM_LIMIT,
        ),
        cost_estimate=pl.CostEstimate(
            flops=flops, transcendentals=0, bytes_accessed=bytes_accessed),
    )(a, x, w1, b1, w2)


# ----------------------------------------------------------------------------
# Tiled layer 2: out = log_softmax(A @ HW + b2), accumulate into f32 output.
# ----------------------------------------------------------------------------
def _agg2_kernel(a_ref, y_ref, b_ref, o_ref, *, num_valid):
    k = pl.program_id(1)

    @pl.when(k == 0)
    def _():
        o_ref[...] = jnp.zeros_like(o_ref)

    # Output block index (i, 0) is constant across k -> f32 output block stays
    # resident in VMEM, so accumulate in place (no extra scratch buffer).
    o_ref[...] += jnp.dot(a_ref[...], y_ref[...], preferred_element_type=jnp.float32)

    @pl.when(k == pl.num_programs(1) - 1)
    def _():
        o_ref[...] = _masked_log_softmax(o_ref[...] + b_ref[...], num_valid)


def _agg_layer2(a, y, b, *, tm, tk, num_valid):
    n_pad = a.shape[0]
    cp = y.shape[1]
    grid_i = n_pad // tm
    grid_k = n_pad // tk
    bytes_accessed = (a.size * 2 + grid_i * y.size * 2 + n_pad * cp * 4 + cp * 4)
    return pl.pallas_call(
        functools.partial(_agg2_kernel, num_valid=num_valid),
        out_shape=jax.ShapeDtypeStruct((n_pad, cp), jnp.float32),
        grid=(grid_i, grid_k),
        in_specs=[
            pl.BlockSpec((tm, tk), lambda i, k: (i, k)),   # A tile
            pl.BlockSpec((tk, cp), lambda i, k: (k, 0)),   # HW tile (bf16, lane-dense)
            pl.BlockSpec((1, cp), lambda i, k: (0, 0)),    # b2 resident
        ],
        out_specs=pl.BlockSpec((tm, cp), lambda i, k: (i, 0)),
        compiler_params=pltpu.CompilerParams(
            dimension_semantics=("parallel", "arbitrary"),
            vmem_limit_bytes=_VMEM_LIMIT,
        ),
        cost_estimate=pl.CostEstimate(
            flops=2 * n_pad * n_pad * cp,
            transcendentals=n_pad * cp,
            bytes_accessed=bytes_accessed),
    )(a, y, b)


# ----------------------------------------------------------------------------
# Forward wrapper
# ----------------------------------------------------------------------------
@functools.partial(jax.jit, static_argnames=("tm", "tk", "force_tiled"))
def digcn_forward(adj, x, w1, b1, w2, b2, *, tm=512, tk=512, force_tiled=False):
    """adj: (N, N) f32 dense adjacency (adj[dst, src] = w); x: (N, F) f32."""
    n, f = x.shape
    hidden = w1.shape[1]
    c = w2.shape[1]
    hp = _round_up(hidden, 128)   # lane-dense hidden
    cp = _round_up(c, 128)        # lane-dense logits

    # Padded parameters (padded lanes/rows are zero -> exact for real lanes).
    w1_p = jnp.zeros((f, hp), jnp.bfloat16).at[:, :hidden].set(w1.astype(jnp.bfloat16))
    b1_p = jnp.zeros((1, hp), jnp.float32).at[:, :hidden].set(b1)
    w2_p = jnp.zeros((hp, cp), jnp.bfloat16).at[:hidden, :c].set(w2.astype(jnp.bfloat16))
    b2_p = jnp.zeros((1, cp), jnp.float32).at[:, :c].set(b2)

    # Small-graph fast path: keep A resident in VMEM, one fused kernel.
    n_small = _round_up(n, 128)
    if (not force_tiled) and n_small <= 2048:
        a_p = jnp.zeros((n_small, n_small), jnp.bfloat16).at[:n, :n].set(
            adj.astype(jnp.bfloat16))
        x_p = jnp.zeros((n_small, f), jnp.bfloat16).at[:n].set(x.astype(jnp.bfloat16))
        z = _fused_forward(a_p, x_p, w1_p, b1_p, w2_p, b2_p, num_valid=c)
        return z[:n, :c]

    # Tiled path for large graphs.
    if max(tm, tk) % min(tm, tk) != 0:
        raise ValueError("tm and tk must divide each other (avoids padding blowup)")
    n_pad = _round_up(n, max(tm, tk))   # square A keeps layer-2 Y rows aligned
    a_p = jnp.zeros((n_pad, n_pad), jnp.bfloat16).at[:n, :n].set(
        adj.astype(jnp.bfloat16))
    x_p = jnp.zeros((n_pad, f), jnp.bfloat16).at[:n].set(x.astype(jnp.bfloat16))

    hw = _agg_layer1(a_p, x_p, w1_p, b1_p, w2_p, tm=tm, tk=tk)
    z = _agg_layer2(a_p, hw, b2_p, tm=tm, tk=tk, num_valid=c)
    return z[:n, :c]


# ----------------------------------------------------------------------------
# Glue / demo
# ----------------------------------------------------------------------------
def glorot(key, shape):
    a = jnp.sqrt(6.0 / (shape[0] + shape[1]))
    return jax.random.uniform(key, shape, jnp.float32, -a, a)


def densify_adjacency(edge_index, edge_weight, num_nodes):
    src, dst = edge_index[0], edge_index[1]
    adj = jnp.zeros((num_nodes, num_nodes), jnp.float32)
    return adj.at[dst, src].add(edge_weight)


if __name__ == "__main__":
    key = jax.random.PRNGKey(0)
    k_x, k_e, k_w, k_w1, k_w2 = jax.random.split(key, 5)

    num_nodes = 300
    num_features = 16
    hidden = 32
    label_dim = 8
    num_edges = 1200

    x = jax.random.normal(k_x, (num_nodes, num_features), jnp.float32)
    edge_index = jax.random.randint(k_e, (2, num_edges), 0, num_nodes)
    edge_weight = jax.random.uniform(k_w, (num_edges,), jnp.float32, 0.1, 1.0)
    adj = densify_adjacency(edge_index, edge_weight, num_nodes)

    w1 = glorot(k_w1, (num_features, hidden))
    b1 = jnp.zeros((1, hidden), jnp.float32)
    w2 = glorot(k_w2, (hidden, label_dim))
    b2 = jnp.zeros((1, label_dim), jnp.float32)

    # Reference mirroring the kernels' bf16/f32 precision staging.
    a_bf = adj.astype(jnp.bfloat16)
    x_bf = x.astype(jnp.bfloat16)
    w1_bf = w1.astype(jnp.bfloat16)
    w2_bf = w2.astype(jnp.bfloat16)
    xw_r = jnp.dot(x_bf, w1_bf, preferred_element_type=jnp.float32).astype(jnp.bfloat16)
    h_r = jnp.maximum(
        jnp.dot(a_bf, xw_r, preferred_element_type=jnp.float32) + b1, 0.0
    ).astype(jnp.bfloat16)
    hw_r = jnp.dot(h_r, w2_bf, preferred_element_type=jnp.float32).astype(jnp.bfloat16)
    z_r = jnp.dot(a_bf, hw_r, preferred_element_type=jnp.float32) + b2
    ref = jax.nn.log_softmax(z_r, axis=1)

    # 1) Fused small-graph path (auto-dispatched for N=300).
    out_fused = jax.block_until_ready(digcn_forward(adj, x, w1, b1, w2, b2))
    assert out_fused.shape == (num_nodes, label_dim)
    assert bool(jnp.all(jnp.isfinite(out_fused)))
    assert jnp.allclose(out_fused, ref, atol=2e-2, rtol=2e-2), (
        float(jnp.max(jnp.abs(out_fused - ref))))

    # 2) Tiled large-graph path, forced, with a multi-tile grid (4 row x 2 k).
    out_tiled = jax.block_until_ready(
        digcn_forward(adj, x, w1, b1, w2, b2, tm=128, tk=256, force_tiled=True))
    assert out_tiled.shape == (num_nodes, label_dim)
    assert bool(jnp.all(jnp.isfinite(out_tiled)))
    assert jnp.allclose(out_tiled, ref, atol=2e-2, rtol=2e-2), (
        float(jnp.max(jnp.abs(out_tiled - ref))))

    print("KERNEL_OK")
</pallas_src>

<mosaic_0001>
module attributes {stable_mosaic.version = 11 : i64} {
  func.func @_fused_kernel(%arg0: i32, %arg1: memref<384x384xbf16, #tpu.memory_space<vmem>>, %arg2: memref<384x16xbf16, #tpu.memory_space<vmem>>, %arg3: memref<16x128xbf16, #tpu.memory_space<vmem>>, %arg4: memref<1x128xf32, #tpu.memory_space<vmem>>, %arg5: memref<128x128xbf16, #tpu.memory_space<vmem>>, %arg6: memref<1x128xf32, #tpu.memory_space<vmem>>, %arg7: memref<384x128xf32, #tpu.memory_space<vmem>>) attributes {dimension_semantics = [#tpu.dimension_semantics<arbitrary>], iteration_bounds = array<i64: 1>, scalar_prefetch = 0 : i64, scratch_operands = 0 : i64, tpu.core_type = #tpu.core_type<tc>, window_params = [{pipeline_mode = #tpu.pipeline_mode<synchronous>, transform_indices = @transform_0, window_bounds = array<i64: 384, 384>}, {pipeline_mode = #tpu.pipeline_mode<synchronous>, transform_indices = @transform_1, window_bounds = array<i64: 384, 16>}, {pipeline_mode = #tpu.pipeline_mode<synchronous>, transform_indices = @transform_2, window_bounds = array<i64: 16, 128>}, {pipeline_mode = #tpu.pipeline_mode<synchronous>, transform_indices = @transform_3, window_bounds = array<i64: 1, 128>}, {pipeline_mode = #tpu.pipeline_mode<synchronous>, transform_indices = @transform_4, window_bounds = array<i64: 128, 128>}, {pipeline_mode = #tpu.pipeline_mode<synchronous>, transform_indices = @transform_5, window_bounds = array<i64: 1, 128>}, {pipeline_mode = #tpu.pipeline_mode<synchronous>, transform_indices = @transform_6, window_bounds = array<i64: 384, 128>}]} {
    %c0 = arith.constant 0 : index
    %c0_0 = arith.constant 0 : index
    %0 = vector.load %arg2[%c0, %c0_0] : memref<384x16xbf16, #tpu.memory_space<vmem>>, vector<384x16xbf16>
    %c0_1 = arith.constant 0 : index
    %c0_2 = arith.constant 0 : index
    %1 = vector.load %arg3[%c0_1, %c0_2] : memref<16x128xbf16, #tpu.memory_space<vmem>>, vector<16x128xbf16>
    %cst = arith.constant dense<0.000000e+00> : vector<384x128xf32>
    %2 = tpu.matmul %0, %1, %cst {dimension_numbers = #tpu.dot_dimension_numbers<[1], [0], [0], [1], [0, 0, 1, 1], [], []>} : vector<384x16xbf16>, vector<16x128xbf16>, vector<384x128xf32> -> vector<384x128xf32>
    %3 = arith.truncf %2 : vector<384x128xf32> to vector<384x128xbf16>
    %c0_3 = arith.constant 0 : index
    %c0_4 = arith.constant 0 : index
    %4 = vector.load %arg1[%c0_3, %c0_4] : memref<384x384xbf16, #tpu.memory_space<vmem>>, vector<384x384xbf16>
    %cst_5 = arith.constant dense<0.000000e+00> : vector<384x128xf32>
    %5 = tpu.matmul %4, %3, %cst_5 {dimension_numbers = #tpu.dot_dimension_numbers<[1], [0], [0], [1], [0, 0, 1, 1], [], []>} : vector<384x384xbf16>, vector<384x128xbf16>, vector<384x128xf32> -> vector<384x128xf32>
    %c0_6 = arith.constant 0 : index
    %c0_7 = arith.constant 0 : index
    %6 = vector.load %arg4[%c0_6, %c0_7] : memref<1x128xf32, #tpu.memory_space<vmem>>, vector<1x128xf32>
    %7 = vector.broadcast %6 : vector<1x128xf32> to vector<384x128xf32>
    %8 = arith.addf %5, %7 : vector<384x128xf32>
    %cst_8 = arith.constant 0.000000e+00 : f32
    %9 = vector.broadcast %cst_8 : f32 to vector<384x128xf32>
    %10 = arith.maximumf %8, %9 : vector<384x128xf32>
    %11 = arith.truncf %10 : vector<384x128xf32> to vector<384x128xbf16>
    %c0_9 = arith.constant 0 : index
    %c0_10 = arith.constant 0 : index
    %12 = vector.load %arg5[%c0_9, %c0_10] : memref<128x128xbf16, #tpu.memory_space<vmem>>, vector<128x128xbf16>
    %cst_11 = arith.constant dense<0.000000e+00> : vector<384x128xf32>
    %13 = tpu.matmul %11, %12, %cst_11 {dimension_numbers = #tpu.dot_dimension_numbers<[1], [0], [0], [1], [0, 0, 1, 1], [], []>} : vector<384x128xbf16>, vector<128x128xbf16>, vector<384x128xf32> -> vector<384x128xf32>
    %14 = arith.truncf %13 : vector<384x128xf32> to vector<384x128xbf16>
    %c0_12 = arith.constant 0 : index
    %c0_13 = arith.constant 0 : index
    %15 = vector.load %arg1[%c0_12, %c0_13] : memref<384x384xbf16, #tpu.memory_space<vmem>>, vector<384x384xbf16>
    %cst_14 = arith.constant dense<0.000000e+00> : vector<384x128xf32>
    %16 = tpu.matmul %15, %14, %cst_14 {dimension_numbers = #tpu.dot_dimension_numbers<[1], [0], [0], [1], [0, 0, 1, 1], [], []>} : vector<384x384xbf16>, vector<384x128xbf16>, vector<384x128xf32> -> vector<384x128xf32>
    %c0_15 = arith.constant 0 : index
    %c0_16 = arith.constant 0 : index
    %17 = vector.load %arg6[%c0_15, %c0_16] : memref<1x128xf32, #tpu.memory_space<vmem>>, vector<1x128xf32>
    %18 = vector.broadcast %17 : vector<1x128xf32> to vector<384x128xf32>
    %19 = arith.addf %16, %18 : vector<384x128xf32>
    %20 = tpu.iota {dimensions = array<i32: 1>} : vector<384x128xi32>
    %c8_i32 = arith.constant 8 : i32
    %21 = vector.broadcast %c8_i32 : i32 to vector<384x128xi32>
    %22 = arith.cmpi slt, %20, %21 : vector<384x128xi32>
    %cst_17 = arith.constant -1.000000e+30 : f32
    %23 = vector.broadcast %cst_17 : f32 to vector<384x128xf32>
    %24 = arith.select %22, %19, %23 : vector<384x128xi1>, vector<384x128xf32>
    %cst_18 = arith.constant dense<0xFF800000> : vector<384xf32>
    %25 = vector.multi_reduction <maximumf>, %24, %cst_18 [1] : vector<384x128xf32> to vector<384xf32>
    %26 = vector.shape_cast %25 : vector<384xf32> to vector<384x1xf32>
    %27 = vector.broadcast %26 : vector<384x1xf32> to vector<384x128xf32>
    %28 = arith.subf %24, %27 : vector<384x128xf32>
    %29 = math.exp %28 : vector<384x128xf32>
    %cst_19 = arith.constant dense<0.000000e+00> : vector<384xf32>
    %30 = vector.multi_reduction <add>, %29, %cst_19 [1] : vector<384x128xf32> to vector<384xf32>
    %31 = vector.shape_cast %30 : vector<384xf32> to vector<384x1xf32>
    %32 = math.log %31 : vector<384x1xf32>
    %33 = vector.broadcast %32 : vector<384x1xf32> to vector<384x128xf32>
    %34 = arith.subf %28, %33 : vector<384x128xf32>
    %c0_20 = arith.constant 0 : index
    %c0_21 = arith.constant 0 : index
    %35 = vector.load %arg7[%c0_20, %c0_21] : memref<384x128xf32, #tpu.memory_space<vmem>>, vector<384x128xf32>
    tpu.vector_store %arg7[%c0_20, %c0_21], %34 {strides = array<i32>} : memref<384x128xf32, #tpu.memory_space<vmem>>, vector<384x128xf32>,
    return
  }
  func.func @transform_0(%arg0: i32) -> (i32, i32) {
    %c0_i32 = arith.constant 0 : i32
    %c0_i32_0 = arith.constant 0 : i32
    %c0_i32_1 = arith.constant 0 : i32
    return %c0_i32, %c0_i32_0 : i32, i32
  }
  func.func @transform_1(%arg0: i32) -> (i32, i32) {
    %c0_i32 = arith.constant 0 : i32
    %c0_i32_0 = arith.constant 0 : i32
    %c0_i32_1 = arith.constant 0 : i32
    return %c0_i32, %c0_i32_0 : i32, i32
  }
  func.func @transform_2(%arg0: i32) -> (i32, i32) {
    %c0_i32 = arith.constant 0 : i32
    %c0_i32_0 = arith.constant 0 : i32
    %c0_i32_1 = arith.constant 0 : i32
    return %c0_i32, %c0_i32_0 : i32, i32
  }
  func.func @transform_3(%arg0: i32) -> (i32, i32) {
    %c0_i32 = arith.constant 0 : i32
    %c0_i32_0 = arith.constant 0 : i32
    %c0_i32_1 = arith.constant 0 : i32
    return %c0_i32, %c0_i32_0 : i32, i32
  }
  func.func @transform_4(%arg0: i32) -> (i32, i32) {
    %c0_i32 = arith.constant 0 : i32
    %c0_i32_0 = arith.constant 0 : i32
    %c0_i32_1 = arith.constant 0 : i32
    return %c0_i32, %c0_i32_0 : i32, i32
  }
  func.func @transform_5(%arg0: i32) -> (i32, i32) {
    %c0_i32 = arith.constant 0 : i32
    %c0_i32_0 = arith.constant 0 : i32
    %c0_i32_1 = arith.constant 0 : i32
    return %c0_i32, %c0_i32_0 : i32, i32
  }
  func.func @transform_6(%arg0: i32) -> (i32, i32) {
    %c0_i32 = arith.constant 0 : i32
    %c0_i32_0 = arith.constant 0 : i32
    %c0_i32_1 = arith.constant 0 : i32
    return %c0_i32, %c0_i32_0 : i32, i32
  }
}

</mosaic_0001>

<llo_original>
// kernel: digcn_forward.1
$region0: #{digcn_forward.1}
  #allocation0 [shape = 'u32[]', space=smem, size = 0x4, offset = 0x4, fixed_abs, tag = 'smem constant byte address 0x4 - core index']
  #allocation1 [shape = 'u32[144,128]{1,0:T(1,128)}', space=vmem, size = 0x12000, scoped, tag = 'internal scratch']
  %s0 = inlined_call_operand.vmem [shape: bf16[384,384], index: 0, kind: input, shape index: {}]
  %s1 = inlined_call_operand.vmem [shape: bf16[384,16], index: 1, kind: input, shape index: {}]
  %s2 = inlined_call_operand.vmem [shape: bf16[16,128], index: 2, kind: input, shape index: {}]
  %s3 = inlined_call_operand.vmem [shape: f32[1,128], index: 3, kind: input, shape index: {}]
  %s4 = inlined_call_operand.vmem [shape: bf16[128,128], index: 4, kind: input, shape index: {}]
  %s5 = inlined_call_operand.vmem [shape: f32[1,128], index: 5, kind: input, shape index: {}]
  %s6 = inlined_call_operand.vmem [shape: f32[384,128], index: 6, kind: output, shape index: {}]
  %s7 = sld [smem:[#allocation0]]
  $region34: #{digcn_forward.1} parent=0
    _
  %s9 = ssub.s32 1, %s7
  %s10 = scalar_select 0, %s9, %s7
  // Predicated region
  $region2: #{digcn_forward.1} parent=0 // pred_check
    _
  $region3: #{digcn_forward.1} parent=0 // pred_check_branch
    %12 = sbr.rel (0) target = $region5
  $region4: #{digcn_forward.1} parent=0 // pred_region
    _
  $region5: #{digcn_forward.1} parent=0 // pred_fallthru
    _
  // Predicated region
  $region6: #{digcn_forward.1} parent=0 // pred_check
    _
  $region7: #{digcn_forward.1} parent=0 // pred_check_branch
    %14 = sbr.rel (0) target = $region9
  $region8: #{digcn_forward.1} parent=0 // pred_region
    _
  $region9: #{digcn_forward.1} parent=0 // pred_fallthru
    _
  // Predicated region
  $region10: #{digcn_forward.1} parent=0 // pred_check
    _
  $region11: #{digcn_forward.1} parent=0 // pred_check_branch
    %16 = sbr.rel (0) target = $region13
  $region12: #{digcn_forward.1} parent=0 // pred_region
    _
  $region13: #{digcn_forward.1} parent=0 // pred_fallthru
    _
  // Predicated region
  $region14: #{digcn_forward.1} parent=0 // pred_check
    _
  $region15: #{digcn_forward.1} parent=0 // pred_check_branch
    %18 = sbr.rel (0) target = $region17
  $region16: #{digcn_forward.1} parent=0 // pred_region
    _
  $region17: #{digcn_forward.1} parent=0 // pred_fallthru
    _
  // Predicated region
  $region18: #{digcn_forward.1} parent=0 // pred_check
    _
  $region19: #{digcn_forward.1} parent=0 // pred_check_branch
    %20 = sbr.rel (0) target = $region21
  $region20: #{digcn_forward.1} parent=0 // pred_region
    _
  $region21: #{digcn_forward.1} parent=0 // pred_fallthru
    _
  // Predicated region
  $region22: #{digcn_forward.1} parent=0 // pred_check
    _
  $region23: #{digcn_forward.1} parent=0 // pred_check_branch
    %22 = sbr.rel (0) target = $region25
  $region24: #{digcn_forward.1} parent=0 // pred_region
    _
  $region25: #{digcn_forward.1} parent=0 // pred_fallthru
    _
  %v24 = vld [vmem:[%s1] sm:$0xf]
  %v25 = vld [vmem:[%s1 + $0x4] sm:$0xf]
  %v26 = vld [vmem:[%s1 + $0x8] sm:$0xf]
  %v27 = vld [vmem:[%s1 + $0xc] sm:$0xf]
  %v28 = vld [vmem:[%s1 + $0x10] sm:$0xf]
  %v29 = vld [vmem:[%s1 + $0x14] sm:$0xf]
  %v30 = vld [vmem:[%s1 + $0x18] sm:$0xf]
  %v31 = vld [vmem:[%s1 + $0x1c] sm:$0xf]
  %v32 = vld [vmem:[%s1 + $0x20] sm:$0xf]
  %v33 = vld [vmem:[%s1 + $0x24] sm:$0xf]
  %v34 = vld [vmem:[%s1 + $0x28] sm:$0xf]
  %v35 = vld [vmem:[%s1 + $0x2c] sm:$0xf]
  %v36 = vld [vmem:[%s1 + $0x30] sm:$0xf]
  %v37 = vld [vmem:[%s1 + $0x34] sm:$0xf]
  %v38 = vld [vmem:[%s1 + $0x38] sm:$0xf]
  %v39 = vld [vmem:[%s1 + $0x3c] sm:$0xf]
  %v40 = vld [vmem:[%s1 + $0x40] sm:$0xf]
  %v41 = vld [vmem:[%s1 + $0x44] sm:$0xf]
  %v42 = vld [vmem:[%s1 + $0x48] sm:$0xf]
  %v43 = vld [vmem:[%s1 + $0x4c] sm:$0xf]
  %v44 = vld [vmem:[%s1 + $0x50] sm:$0xf]
  %v45 = vld [vmem:[%s1 + $0x54] sm:$0xf]
  %v46 = vld [vmem:[%s1 + $0x58] sm:$0xf]
  %v47 = vld [vmem:[%s1 + $0x5c] sm:$0xf]
  %v48 = vld [vmem:[%s1 + $0x60] sm:$0xf]
  %v49 = vld [vmem:[%s1 + $0x64] sm:$0xf]
  %v50 = vld [vmem:[%s1 + $0x68] sm:$0xf]
  %v51 = vld [vmem:[%s1 + $0x6c] sm:$0xf]
  %v52 = vld [vmem:[%s1 + $0x70] sm:$0xf]
  %v53 = vld [vmem:[%s1 + $0x74] sm:$0xf]
  %v54 = vld [vmem:[%s1 + $0x78] sm:$0xf]
  %v55 = vld [vmem:[%s1 + $0x7c] sm:$0xf]
  %v56 = vld [vmem:[%s1 + $0x80] sm:$0xf]
  %v57 = vld [vmem:[%s1 + $0x84] sm:$0xf]
  %v58 = vld [vmem:[%s1 + $0x88] sm:$0xf]
  %v59 = vld [vmem:[%s1 + $0x8c] sm:$0xf]
  %v60 = vld [vmem:[%s1 + $0x90] sm:$0xf]
  %v61 = vld [vmem:[%s1 + $0x94] sm:$0xf]
  %v62 = vld [vmem:[%s1 + $0x98] sm:$0xf]
  %v63 = vld [vmem:[%s1 + $0x9c] sm:$0xf]
  %v64 = vld [vmem:[%s1 + $0xa0] sm:$0xf]
  %v65 = vld [vmem:[%s1 + $0xa4] sm:$0xf]
  %v66 = vld [vmem:[%s1 + $0xa8] sm:$0xf]
  %v67 = vld [vmem:[%s1 + $0xac] sm:$0xf]
  %v68 = vld [vmem:[%s1 + $0xb0] sm:$0xf]
  %v69 = vld [vmem:[%s1 + $0xb4] sm:$0xf]
  %v70 = vld [vmem:[%s1 + $0xb8] sm:$0xf]
  %v71 = vld [vmem:[%s1 + $0xbc] sm:$0xf]
  %v72 = vld [vmem:[%s2] sm:$0xf]
  %v73 = vld [vmem:[%s2 + $0x4] sm:$0xf]
  %v122 = vunpack.c.l.b16 %v24
  %v123 = vunpack.c.l.b16 %v25
  %v124 = vunpack.c.l.b16 %v26
  %v125 = vunpack.c.l.b16 %v27
  %v126 = vunpack.c.l.b16 %v28
  %v127 = vunpack.c.l.b16 %v29
  %v128 = vunpack.c.l.b16 %v30
  %v129 = vunpack.c.l.b16 %v31
  %v130 = vunpack.c.l.b16 %v32
  %v131 = vunpack.c.l.b16 %v33
  %v132 = vunpack.c.l.b16 %v34
  %v133 = vunpack.c.l.b16 %v35
  %v134 = vunpack.c.l.b16 %v36
  %v135 = vunpack.c.l.b16 %v37
  %v136 = vunpack.c.l.b16 %v38
  %v137 = vunpack.c.l.b16 %v39
  %v138 = vunpack.c.l.b16 %v40
  %v139 = vunpack.c.l.b16 %v41
  %v140 = vunpack.c.l.b16 %v42
  %v141 = vunpack.c.l.b16 %v43
  %v142 = vunpack.c.l.b16 %v44
  %v143 = vunpack.c.l.b16 %v45
  %v144 = vunpack.c.l.b16 %v46
  %v145 = vunpack.c.l.b16 %v47
  %v146 = vunpack.c.l.b16 %v48
  %v147 = vunpack.c.l.b16 %v49
  %v148 = vunpack.c.l.b16 %v50
  %v149 = vunpack.c.l.b16 %v51
  %v150 = vunpack.c.l.b16 %v52
  %v151 = vunpack.c.l.b16 %v53
  %v152 = vunpack.c.l.b16 %v54
  %v153 = vunpack.c.l.b16 %v55
  %v154 = vunpack.c.l.b16 %v56
  %v155 = vunpack.c.l.b16 %v57
  %v156 = vunpack.c.l.b16 %v58
  %v157 = vunpack.c.l.b16 %v59
  %v158 = vunpack.c.l.b16 %v60
  %v159 = vunpack.c.l.b16 %v61
  %v160 = vunpack.c.l.b16 %v62
  %v161 = vunpack.c.l.b16 %v63
  %v162 = vunpack.c.l.b16 %v64
  %v163 = vunpack.c.l.b16 %v65
  %v164 = vunpack.c.l.b16 %v66
  %v165 = vunpack.c.l.b16 %v67
  %v166 = vunpack.c.l.b16 %v68
  %v167 = vunpack.c.l.b16 %v69
  %v168 = vunpack.c.l.b16 %v70
  %v169 = vunpack.c.l.b16 %v71
  %v170 = vpack.c.b16 %v123, %v122
  %v171 = vpack.c.b16 %v125, %v124
  %v172 = vpack.c.b16 %v127, %v126
  %v173 = vpack.c.b16 %v129, %v128
  %v174 = vpack.c.b16 %v131, %v130
  %v175 = vpack.c.b16 %v133, %v132
  %v176 = vpack.c.b16 %v135, %v134
  %v177 = vpack.c.b16 %v137, %v136
  %v178 = vpack.c.b16 %v139, %v138
  %v179 = vpack.c.b16 %v141, %v140
  %v180 = vpack.c.b16 %v143, %v142
  %v181 = vpack.c.b16 %v145, %v144
  %v182 = vpack.c.b16 %v147, %v146
  %v183 = vpack.c.b16 %v149, %v148
  %v184 = vpack.c.b16 %v151, %v150
  %v185 = vpack.c.b16 %v153, %v152
  %v186 = vpack.c.b16 %v155, %v154
  %v187 = vpack.c.b16 %v157, %v156
  %v188 = vpack.c.b16 %v159, %v158
  %v189 = vpack.c.b16 %v161, %v160
  %v190 = vpack.c.b16 %v163, %v162
  %v191 = vpack.c.b16 %v165, %v164
  %v192 = vpack.c.b16 %v167, %v166
  %v193 = vpack.c.b16 %v169, %v168
  %v196 = vunpack.c.l.b16 %v72
  %v197 = vunpack.c.l.b16 %v73
  %v198 = vpack.c.b16 %v197, %v196
  %vm200 = vcmask 130048
  %v202 = vsel %vm200, %v170, 0
  %v205 = vsel %vm200, %v171, 0
  %v208 = vsel %vm200, %v172, 0
  %v211 = vsel %vm200, %v173, 0
  %v214 = vsel %vm200, %v174, 0
  %v217 = vsel %vm200, %v175, 0
  %v220 = vsel %vm200, %v176, 0
  %v223 = vsel %vm200, %v177, 0
  %v226 = vsel %vm200, %v178, 0
  %v229 = vsel %vm200, %v179, 0
  %v232 = vsel %vm200, %v180, 0
  %v235 = vsel %vm200, %v181, 0
  %v238 = vsel %vm200, %v182, 0
  %v241 = vsel %vm200, %v183, 0
  %v244 = vsel %vm200, %v184, 0
  %v247 = vsel %vm200, %v185, 0
  %v250 = vsel %vm200, %v186, 0
  %v253 = vsel %vm200, %v187, 0
  %v256 = vsel %vm200, %v188, 0
  %v259 = vsel %vm200, %v189, 0
  %v262 = vsel %vm200, %v190, 0
  %v265 = vsel %vm200, %v191, 0
  %v268 = vsel %vm200, %v192, 0
  %v271 = vsel %vm200, %v193, 0
  %273 = vmatprep.subr.bf16.mxu0 0
  %274 = vmatpush1.bf16.msra.mxu0 %v198
  %275 = vmatprep.subr.bf16.mxu0 0
  %276 = vmatpush1.bf16.msra.mxu0 0
  %277 = vmatprep.subr.bf16.mxu0 0
  %278 = vmatpush1.bf16.msra.mxu0 0
  %279 = vmatprep.subr.bf16.mxu0 0
  %280 = vmatpush1.bf16.msra.mxu0 0
  %281 = vmatprep.subr.bf16.mxu0 0
  %282 = vmatpush1.bf16.msra.mxu0 0
  %283 = vmatprep.subr.bf16.mxu0 0
  %284 = vmatpush1.bf16.msra.mxu0 0
  %285 = vmatprep.subr.bf16.mxu0 0
  %286 = vmatpush1.bf16.msra.mxu0 0
  %287 = vmatprep.subr.bf16.mxu0 0
  %288 = vmatpush1.bf16.msra.mxu0 0
  %289 = vmatprep.subr.bf16.mxu0 0
  %290 = vmatpush1.bf16.msra.mxu0 0
  %291 = vmatprep.subr.bf16.mxu0 0
  %292 = vmatpush1.bf16.msra.mxu0 0
  %293 = vmatprep.subr.bf16.mxu0 0
  %294 = vmatpush1.bf16.msra.mxu0 0
  %295 = vmatprep.subr.bf16.mxu0 0
  %296 = vmatpush1.bf16.msra.mxu0 0
  %297 = vmatprep.subr.bf16.mxu0 0
  %298 = vmatpush1.bf16.msra.mxu0 0
  %299 = vmatprep.subr.bf16.mxu0 0
  %300 = vmatpush1.bf16.msra.mxu0 0
  %301 = vmatprep.subr.bf16.mxu0 0
  %302 = vmatpush1.bf16.msra.mxu0 0
  %303 = vmatprep.subr.bf16.mxu0 0
  %304 = vmatpush1.bf16.msra.mxu0 0
  %305 = vmatprep.mubr.bf16.mxu0 0
  %306 = vmatmul.mubr.bf16.gmra.mrb[0].mxu0 %v202
  %v307 = vpop.f32.mrb[0].mxu0
  %v308 = vadd.f32 0.0, %v307
  %v309 = vpop.f32.mrb[0].mxu0
  %v310 = vpop.f32.mrb[0].mxu0
  %v311 = vadd.f32 0.0, %v310
  %v312 = vpop.f32.mrb[0].mxu0
  %313 = vmatprep.mubr.bf16.mxu0 0
  %314 = vmatmul.mubr.bf16.gmra.mrb[0].mxu0 %v205
  %v315 = vpop.f32.mrb[0].mxu0
  %v316 = vadd.f32 0.0, %v315
  %v317 = vpop.f32.mrb[0].mxu0
  %v318 = vpop.f32.mrb[0].mxu0
  %v319 = vadd.f32 0.0, %v318
  %v320 = vpop.f32.mrb[0].mxu0
  %321 = vmatprep.mubr.bf16.mxu0 0
  %322 = vmatmul.mubr.bf16.gmra.mrb[0].mxu0 %v208
  %v323 = vpop.f32.mrb[0].mxu0
  %v324 = vadd.f32 0.0, %v323
  %v325 = vpop.f32.mrb[0].mxu0
  %v326 = vpop.f32.mrb[0].mxu0
  %v327 = vadd.f32 0.0, %v326
  %v328 = vpop.f32.mrb[0].mxu0
  %329 = vmatprep.mubr.bf16.mxu0 0
  %330 = vmatmul.mubr.bf16.gmra.mrb[0].mxu0 %v211
  %v331 = vpop.f32.mrb[0].mxu0
  %v332 = vadd.f32 0.0, %v331
  %v333 = vpop.f32.mrb[0].mxu0
  %v334 = vpop.f32.mrb[0].mxu0
  %v335 = vadd.f32 0.0, %v334
  %v336 = vpop.f32.mrb[0].mxu0
  %337 = vmatprep.mubr.bf16.mxu0 0
  %338 = vmatmul.mubr.bf16.gmra.mrb[0].mxu0 %v214
  %v339 = vpop.f32.mrb[0].mxu0
  %v340 = vadd.f32 0.0, %v339
  %v341 = vpop.f32.mrb[0].mxu0
  %v342 = vpop.f32.mrb[0].mxu0
  %v343 = vadd.f32 0.0, %v342
  %v344 = vpop.f32.mrb[0].mxu0
  %345 = vmatprep.mubr.bf16.mxu0 0
  %346 = vmatmul.mubr.bf16.gmra.mrb[0].mxu0 %v217
  %v347 = vpop.f32.mrb[0].mxu0
  %v348 = vadd.f32 0.0, %v347
  %v349 = vpop.f32.mrb[0].mxu0
  %v350 = vpop.f32.mrb[0].mxu0
  %v351 = vadd.f32 0.0, %v350
  %v352 = vpop.f32.mrb[0].mxu0
  %353 = vmatprep.mubr.bf16.mxu0 0
  %354 = vmatmul.mubr.bf16.gmra.mrb[0].mxu0 %v220
  %v355 = vpop.f32.mrb[0].mxu0
  %v356 = vadd.f32 0.0, %v355
  %v357 = vpop.f32.mrb[0].mxu0
  %v358 = vpop.f32.mrb[0].mxu0
  %v359 = vadd.f32 0.0, %v358
  %v360 = vpop.f32.mrb[0].mxu0
  %361 = vmatprep.mubr.bf16.mxu0 0
  %362 = vmatmul.mubr.bf16.gmra.mrb[0].mxu0 %v223
  %v363 = vpop.f32.mrb[0].mxu0
  %v364 = vadd.f32 0.0, %v363
  %v365 = vpop.f32.mrb[0].mxu0
  %v366 = vpop.f32.mrb[0].mxu0
  %v367 = vadd.f32 0.0, %v366
  %v368 = vpop.f32.mrb[0].mxu0
  %369 = vmatprep.mubr.bf16.mxu0 0
  %370 = vmatmul.mubr.bf16.gmra.mrb[0].mxu0 %v226
  %v371 = vpop.f32.mrb[0].mxu0
  %v372 = vadd.f32 0.0, %v371
  %v373 = vpop.f32.mrb[0].mxu0
  %v374 = vpop.f32.mrb[0].mxu0
  %v375 = vadd.f32 0.0, %v374
  %v376 = vpop.f32.mrb[0].mxu0
  %377 = vmatprep.mubr.bf16.mxu0 0
  %378 = vmatmul.mubr.bf16.gmra.mrb[0].mxu0 %v229
  %v379 = vpop.f32.mrb[0].mxu0
  %v380 = vadd.f32 0.0, %v379
  %v381 = vpop.f32.mrb[0].mxu0
  %v382 = vpop.f32.mrb[0].mxu0
  %v383 = vadd.f32 0.0, %v382
  %v384 = vpop.f32.mrb[0].mxu0
  %385 = vmatprep.mubr.bf16.mxu0 0
  %386 = vmatmul.mubr.bf16.gmra.mrb[0].mxu0 %v232
  %v387 = vpop.f32.mrb[0].mxu0
  %v388 = vadd.f32 0.0, %v387
  %v389 = vpop.f32.mrb[0].mxu0
  %v390 = vpop.f32.mrb[0].mxu0
  %v391 = vadd.f32 0.0, %v390
  %v392 = vpop.f32.mrb[0].mxu0
  %393 = vmatprep.mubr.bf16.mxu0 0
  %394 = vmatmul.mubr.bf16.gmra.mrb[0].mxu0 %v235
  %v395 = vpop.f32.mrb[0].mxu0
  %v396 = vadd.f32 0.0, %v395
  %v397 = vpop.f32.mrb[0].mxu0
  %v398 = vpop.f32.mrb[0].mxu0
  %v399 = vadd.f32 0.0, %v398
  %v400 = vpop.f32.mrb[0].mxu0
  %401 = vmatprep.mubr.bf16.mxu0 0
  %402 = vmatmul.mubr.bf16.gmra.mrb[0].mxu0 %v238
  %v403 = vpop.f32.mrb[0].mxu0
  %v404 = vadd.f32 0.0, %v403
  %v405 = vpop.f32.mrb[0].mxu0
  %v406 = vpop.f32.mrb[0].mxu0
  %v407 = vadd.f32 0.0, %v406
  %v408 = vpop.f32.mrb[0].mxu0
  %409 = vmatprep.mubr.bf16.mxu0 0
  %410 = vmatmul.mubr.bf16.gmra.mrb[0].mxu0 %v241
  %v411 = vpop.f32.mrb[0].mxu0
  %v412 = vadd.f32 0.0, %v411
  %v413 = vpop.f32.mrb[0].mxu0
  %v414 = vpop.f32.mrb[0].mxu0
  %v415 = vadd.f32 0.0, %v414
  %v416 = vpop.f32.mrb[0].mxu0
  %417 = vmatprep.mubr.bf16.mxu0 0
  %418 = vmatmul.mubr.bf16.gmra.mrb[0].mxu0 %v244
  %v419 = vpop.f32.mrb[0].mxu0
  %v420 = vadd.f32 0.0, %v419
  %v421 = vpop.f32.mrb[0].mxu0
  %v422 = vpop.f32.mrb[0].mxu0
  %v423 = vadd.f32 0.0, %v422
  %v424 = vpop.f32.mrb[0].mxu0
  %425 = vmatprep.mubr.bf16.mxu0 0
  %426 = vmatmul.mubr.bf16.gmra.mrb[0].mxu0 %v247
  %v427 = vpop.f32.mrb[0].mxu0
  %v428 = vadd.f32 0.0, %v427
  %v429 = vpop.f32.mrb[0].mxu0
  %v430 = vpop.f32.mrb[0].mxu0
  %v431 = vadd.f32 0.0, %v430
  %v432 = vpop.f32.mrb[0].mxu0
  %433 = vmatprep.mubr.bf16.mxu0 0
  %434 = vmatmul.mubr.bf16.gmra.mrb[0].mxu0 %v250
  %v435 = vpop.f32.mrb[0].mxu0
  %v436 = vadd.f32 0.0, %v435
  %v437 = vpop.f32.mrb[0].mxu0
  %v438 = vpop.f32.mrb[0].mxu0
  %v439 = vadd.f32 0.0, %v438
  %v440 = vpop.f32.mrb[0].mxu0
  %441 = vmatprep.mubr.bf16.mxu0 0
  %442 = vmatmul.mubr.bf16.gmra.mrb[0].mxu0 %v253
  %v443 = vpop.f32.mrb[0].mxu0
  %v444 = vadd.f32 0.0, %v443
  %v445 = vpop.f32.mrb[0].mxu0
  %v446 = vpop.f32.mrb[0].mxu0
  %v447 = vadd.f32 0.0, %v446
  %v448 = vpop.f32.mrb[0].mxu0
  %449 = vmatprep.mubr.bf16.mxu0 0
  %450 = vmatmul.mubr.bf16.gmra.mrb[0].mxu0 %v256
  %v451 = vpop.f32.mrb[0].mxu0
  %v452 = vadd.f32 0.0, %v451
  %v453 = vpop.f32.mrb[0].mxu0
  %v454 = vpop.f32.mrb[0].mxu0
  %v455 = vadd.f32 0.0, %v454
  %v456 = vpop.f32.mrb[0].mxu0
  %457 = vmatprep.mubr.bf16.mxu0 0
  %458 = vmatmul.mubr.bf16.gmra.mrb[0].mxu0 %v259
  %v459 = vpop.f32.mrb[0].mxu0
  %v460 = vadd.f32 0.0, %v459
  %v461 = vpop.f32.mrb[0].mxu0
  %v462 = vpop.f32.mrb[0].mxu0
  %v463 = vadd.f32 0.0, %v462
  %v464 = vpop.f32.mrb[0].mxu0
  %465 = vmatprep.mubr.bf16.mxu0 0
  %466 = vmatmul.mubr.bf16.gmra.mrb[0].mxu0 %v262
  %v467 = vpop.f32.mrb[0].mxu0
  %v468 = vadd.f32 0.0, %v467
  %v469 = vpop.f32.mrb[0].mxu0
  %v470 = vpop.f32.mrb[0].mxu0
  %v471 = vadd.f32 0.0, %v470
  %v472 = vpop.f32.mrb[0].mxu0
  %473 = vmatprep.mubr.bf16.mxu0 0
  %474 = vmatmul.mubr.bf16.gmra.mrb[0].mxu0 %v265
  %v475 = vpop.f32.mrb[0].mxu0
  %v476 = vadd.f32 0.0, %v475
  %v477 = vpop.f32.mrb[0].mxu0
  %v478 = vpop.f32.mrb[0].mxu0
  %v479 = vadd.f32 0.0, %v478
  %v480 = vpop.f32.mrb[0].mxu0
  %481 = vmatprep.mubr.bf16.mxu0 0
  %482 = vmatmul.mubr.bf16.gmra.mrb[0].mxu0 %v268
  %v483 = vpop.f32.mrb[0].mxu0
  %v484 = vadd.f32 0.0, %v483
  %v485 = vpop.f32.mrb[0].mxu0
  %v486 = vpop.f32.mrb[0].mxu0
  %v487 = vadd.f32 0.0, %v486
  %v488 = vpop.f32.mrb[0].mxu0
  %489 = vmatprep.mubr.bf16.mxu0 0
  %490 = vmatmul.mubr.bf16.gmra.mrb[0].mxu0 %v271
  %v491 = vpop.f32.mrb[0].mxu0
  %v492 = vadd.f32 0.0, %v491
  %v493 = vpop.f32.mrb[0].mxu0
  %v494 = vpop.f32.mrb[0].mxu0
  %v495 = vadd.f32 0.0, %v494
  %v496 = vpop.f32.mrb[0].mxu0
  %497 = vdwg.mxu0
  %v498 = vpack.c.bf16 %v311, %v308
  %v499 = vpack.c.bf16 %v319, %v316
  %v500 = vpack.c.bf16 %v327, %v324
  %v501 = vpack.c.bf16 %v335, %v332
  %v502 = vpack.c.bf16 %v343, %v340
  %v503 = vpack.c.bf16 %v351, %v348
  %v504 = vpack.c.bf16 %v359, %v356
  %v505 = vpack.c.bf16 %v367, %v364
  %v506 = vpack.c.bf16 %v375, %v372
  %v507 = vpack.c.bf16 %v383, %v380
  %v508 = vpack.c.bf16 %v391, %v388
  %v509 = vpack.c.bf16 %v399, %v396
  %v510 = vpack.c.bf16 %v407, %v404
  %v511 = vpack.c.bf16 %v415, %v412
  %v512 = vpack.c.bf16 %v423, %v420
  %v513 = vpack.c.bf16 %v431, %v428
  %v514 = vpack.c.bf16 %v439, %v436
  %v515 = vpack.c.bf16 %v447, %v444
  %v516 = vpack.c.bf16 %v455, %v452
  %v517 = vpack.c.bf16 %v463, %v460
  %v518 = vpack.c.bf16 %v471, %v468
  %v519 = vpack.c.bf16 %v479, %v476
  %v520 = vpack.c.bf16 %v487, %v484
  %v521 = vpack.c.bf16 %v495, %v492
  %v522 = vld [vmem:[%s0] sm:$0xff]
  %v523 = vld [vmem:[%s0 + $0x8] sm:$0xf]
  %v524 = vld [vmem:[%s0 + $0xc] sm:$0xff]
  %v525 = vld [vmem:[%s0 + $0x14] sm:$0xf]
  %v526 = vld [vmem:[%s0 + $0x18] sm:$0xff]
  %v527 = vld [vmem:[%s0 + $0x20] sm:$0xf]
  %v528 = vld [vmem:[%s0 + $0x24] sm:$0xff]
  %v529 = vld [vmem:[%s0 + $0x2c] sm:$0xf]
  %v530 = vld [vmem:[%s0 + $0x30] sm:$0xff]
  %v531 = vld [vmem:[%s0 + $0x38] sm:$0xf]
  %v532 = vld [vmem:[%s0 + $0x3c] sm:$0xff]
  %v533 = vld [vmem:[%s0 + $0x44] sm:$0xf]
  %v534 = vld [vmem:[%s0 + $0x48] sm:$0xff]
  %v535 = vld [vmem:[%s0 + $0x50] sm:$0xf]
  %v536 = vld [vmem:[%s0 + $0x54] sm:$0xff]
  %v537 = vld [vmem:[%s0 + $0x5c] sm:$0xf]
  %v538 = vld [vmem:[%s0 + $0x60] sm:$0xff]
  %v539 = vld [vmem:[%s0 + $0x68] sm:$0xf]
  %v540 = vld [vmem:[%s0 + $0x6c] sm:$0xff]
  %v541 = vld [vmem:[%s0 + $0x74] sm:$0xf]
  %v542 = vld [vmem:[%s0 + $0x78] sm:$0xff]
  %v543 = vld [vmem:[%s0 + $0x80] sm:$0xf]
  %v544 = vld [vmem:[%s0 + $0x84] sm:$0xff]
  %v545 = vld [vmem:[%s0 + $0x8c] sm:$0xf]
  %v546 = vld [vmem:[%s0 + $0x90] sm:$0xff]
  %v547 = vld [vmem:[%s0 + $0x98] sm:$0xf]
  %v548 = vld [vmem:[%s0 + $0x9c] sm:$0xff]
  %v549 = vld [vmem:[%s0 + $0xa4] sm:$0xf]
  %v550 = vld [vmem:[%s0 + $0xa8] sm:$0xff]
  %v551 = vld [vmem:[%s0 + $0xb0] sm:$0xf]
  %v552 = vld [vmem:[%s0 + $0xb4] sm:$0xff]
  %v553 = vld [vmem:[%s0 + $0xbc] sm:$0xf]
  %v554 = vld [vmem:[%s0 + $0xc0] sm:$0xff]
  %v555 = vld [vmem:[%s0 + $0xc8] sm:$0xf]
  %v556 = vld [vmem:[%s0 + $0xcc] sm:$0xff]
  %v557 = vld [vmem:[%s0 + $0xd4] sm:$0xf]
  %v558 = vld [vmem:[%s0 + $0xd8] sm:$0xff]
  %v559 = vld [vmem:[%s0 + $0xe0] sm:$0xf]
  %v560 = vld [vmem:[%s0 + $0xe4] sm:$0xff]
  %v561 = vld [vmem:[%s0 + $0xec] sm:$0xf]
  %v562 = vld [vmem:[%s0 + $0xf0] sm:$0xff]
  %v563 = vld [vmem:[%s0 + $0xf8] sm:$0xf]
  %v564 = vld [vmem:[%s0 + $0xfc] sm:$0xff]
  %v565 = vld [vmem:[%s0 + $0x104] sm:$0xf]
  %v566 = vld [vmem:[%s0 + $0x108] sm:$0xff]
  %v567 = vld [vmem:[%s0 + $0x110] sm:$0xf]
  %v568 = vld [vmem:[%s0 + $0x114] sm:$0xff]
  %v569 = vld [vmem:[%s0 + $0x11c] sm:$0xf]
  %v570 = vld [vmem:[%s0 + $0x120] sm:$0xff]
  %v571 = vld [vmem:[%s0 + $0x128] sm:$0xf]
  %v572 = vld [vmem:[%s0 + $0x12c] sm:$0xff]
  %v573 = vld [vmem:[%s0 + $0x134] sm:$0xf]
  %v574 = vld [vmem:[%s0 + $0x138] sm:$0xff]
  %v575 = vld [vmem:[%s0 + $0x140] sm:$0xf]
  %v576 = vld [vmem:[%s0 + $0x144] sm:$0xff]
  %v577 = vld [vmem:[%s0 + $0x14c] sm:$0xf]
  %v578 = vld [vmem:[%s0 + $0x150] sm:$0xff]
  %v579 = vld [vmem:[%s0 + $0x158] sm:$0xf]
  %v580 = vld [vmem:[%s0 + $0x15c] sm:$0xff]
  %v581 = vld [vmem:[%s0 + $0x164] sm:$0xf]
  %v582 = vld [vmem:[%s0 + $0x168] sm:$0xff]
  %v583 = vld [vmem:[%s0 + $0x170] sm:$0xf]
  %v584 = vld [vmem:[%s0 + $0x174] sm:$0xff]
  %v585 = vld [vmem:[%s0 + $0x17c] sm:$0xf]
  %v586 = vld [vmem:[%s0 + $0x180] sm:$0xff]
  %v587 = vld [vmem:[%s0 + $0x188] sm:$0xf]
  %v588 = vld [vmem:[%s0 + $0x18c] sm:$0xff]
  %v589 = vld [vmem:[%s0 + $0x194] sm:$0xf]
  %v590 = vld [vmem:[%s0 + $0x198] sm:$0xff]
  %v591 = vld [vmem:[%s0 + $0x1a0] sm:$0xf]
  %v592 = vld [vmem:[%s0 + $0x1a4] sm:$0xff]
  %v593 = vld [vmem:[%s0 + $0x1ac] sm:$0xf]
  %v594 = vld [vmem:[%s0 + $0x1b0] sm:$0xff]
  %v595 = vld [vmem:[%s0 + $0x1b8] sm:$0xf]
  %v596 = vld [vmem:[%s0 + $0x1bc] sm:$0xff]
  %v597 = vld [vmem:[%s0 + $0x1c4] sm:$0xf]
  %v598 = vld [vmem:[%s0 + $0x1c8] sm:$0xff]
  %v599 = vld [vmem:[%s0 + $0x1d0] sm:$0xf]
  %v600 = vld [vmem:[%s0 + $0x1d4] sm:$0xff]
  %v601 = vld [vmem:[%s0 + $0x1dc] sm:$0xf]
  %v602 = vld [vmem:[%s0 + $0x1e0] sm:$0xff]
  %v603 = vld [vmem:[%s0 + $0x1e8] sm:$0xf]
  %v604 = vld [vmem:[%s0 + $0x1ec] sm:$0xff]
  %v605 = vld [vmem:[%s0 + $0x1f4] sm:$0xf]
  %v606 = vld [vmem:[%s0 + $0x1f8] sm:$0xff]
  %v607 = vld [vmem:[%s0 + $0x200] sm:$0xf]
  %v608 = vld [vmem:[%s0 + $0x204] sm:$0xff]
  %v609 = vld [vmem:[%s0 + $0x20c] sm:$0xf]
  %v610 = vld [vmem:[%s0 + $0x210] sm:$0xff]
  %v611 = vld [vmem:[%s0 + $0x218] sm:$0xf]
  %v612 = vld [vmem:[%s0 + $0x21c] sm:$0xff]
  %v613 = vld [vmem:[%s0 + $0x224] sm:$0xf]
  %v614 = vld [vmem:[%s0 + $0x228] sm:$0xff]
  %v615 = vld [vmem:[%s0 + $0x230] sm:$0xf]
  %v616 = vld [vmem:[%s0 + $0x234] sm:$0xff]
  %v617 = vld [vmem:[%s0 + $0x23c] sm:$0xf]
  %v618 = vld [vmem:[%s3] sm:$0x1]
  %v620 = vlaneseq
  %v621 = vshrl.u32 %v620, 7
  %v622 = vsub.s32 0, %v621
  %v623 = vrot.slane %v618, %v622
  %v721 = vunpack.c.l.b16 %v522
  %v722 = vunpack.c.h.b16 %v522
  %v723 = vunpack.c.l.b16 %v523
  %v724 = vunpack.c.l.b16 %v524
  %v725 = vunpack.c.h.b16 %v524
  %v726 = vunpack.c.l.b16 %v525
  %v727 = vunpack.c.l.b16 %v526
  %v728 = vunpack.c.h.b16 %v526
  %v729 = vunpack.c.l.b16 %v527
  %v730 = vunpack.c.l.b16 %v528
  %v731 = vunpack.c.h.b16 %v528
  %v732 = vunpack.c.l.b16 %v529
  %v733 = vunpack.c.l.b16 %v530
  %v734 = vunpack.c.h.b16 %v530
  %v735 = vunpack.c.l.b16 %v531
  %v736 = vunpack.c.l.b16 %v532
  %v737 = vunpack.c.h.b16 %v532
  %v738 = vunpack.c.l.b16 %v533
  %v739 = vunpack.c.l.b16 %v534
  %v740 = vunpack.c.h.b16 %v534
  %v741 = vunpack.c.l.b16 %v535
  %v742 = vunpack.c.l.b16 %v536
  %v743 = vunpack.c.h.b16 %v536
  %v744 = vunpack.c.l.b16 %v537
  %v745 = vunpack.c.l.b16 %v538
  %v746 = vunpack.c.h.b16 %v538
  %v747 = vunpack.c.l.b16 %v539
  %v748 = vunpack.c.l.b16 %v540
  %v749 = vunpack.c.h.b16 %v540
  %v750 = vunpack.c.l.b16 %v541
  %v751 = vunpack.c.l.b16 %v542
  %v752 = vunpack.c.h.b16 %v542
  %v753 = vunpack.c.l.b16 %v543
  %v754 = vunpack.c.l.b16 %v544
  %v755 = vunpack.c.h.b16 %v544
  %v756 = vunpack.c.l.b16 %v545
  %v757 = vunpack.c.l.b16 %v546
  %v758 = vunpack.c.h.b16 %v546
  %v759 = vunpack.c.l.b16 %v547
  %v760 = vunpack.c.l.b16 %v548
  %v761 = vunpack.c.h.b16 %v548
  %v762 = vunpack.c.l.b16 %v549
  %v763 = vunpack.c.l.b16 %v550
  %v764 = vunpack.c.h.b16 %v550
  %v765 = vunpack.c.l.b16 %v551
  %v766 = vunpack.c.l.b16 %v552
  %v767 = vunpack.c.h.b16 %v552
  %v768 = vunpack.c.l.b16 %v553
  %v769 = vunpack.c.l.b16 %v554
  %v770 = vunpack.c.h.b16 %v554
  %v771 = vunpack.c.l.b16 %v555
  %v772 = vunpack.c.l.b16 %v556
  %v773 = vunpack.c.h.b16 %v556
  %v774 = vunpack.c.l.b16 %v557
  %v775 = vunpack.c.l.b16 %v558
  %v776 = vunpack.c.h.b16 %v558
  %v777 = vunpack.c.l.b16 %v559
  %v778 = vunpack.c.l.b16 %v560
  %v779 = vunpack.c.h.b16 %v560
  %v780 = vunpack.c.l.b16 %v561
  %v781 = vunpack.c.l.b16 %v562
  %v782 = vunpack.c.h.b16 %v562
  %v783 = vunpack.c.l.b16 %v563
  %v784 = vunpack.c.l.b16 %v564
  %v785 = vunpack.c.h.b16 %v564
  %v786 = vunpack.c.l.b16 %v565
  %v787 = vunpack.c.l.b16 %v566
  %v788 = vunpack.c.h.b16 %v566
  %v789 = vunpack.c.l.b16 %v567
  %v790 = vunpack.c.l.b16 %v568
  %v791 = vunpack.c.h.b16 %v568
  %v792 = vunpack.c.l.b16 %v569
  %v793 = vunpack.c.l.b16 %v570
  %v794 = vunpack.c.h.b16 %v570
  %v795 = vunpack.c.l.b16 %v571
  %v796 = vunpack.c.l.b16 %v572
  %v797 = vunpack.c.h.b16 %v572
  %v798 = vunpack.c.l.b16 %v573
  %v799 = vunpack.c.l.b16 %v574
  %v800 = vunpack.c.h.b16 %v574
  %v801 = vunpack.c.l.b16 %v575
  %v802 = vunpack.c.l.b16 %v576
  %v803 = vunpack.c.h.b16 %v576
  %v804 = vunpack.c.l.b16 %v577
  %v805 = vunpack.c.l.b16 %v578
  %v806 = vunpack.c.h.b16 %v578
  %v807 = vunpack.c.l.b16 %v579
  %v808 = vunpack.c.l.b16 %v580
  %v809 = vunpack.c.h.b16 %v580
  %v810 = vunpack.c.l.b16 %v581
  %v811 = vunpack.c.l.b16 %v582
  %v812 = vunpack.c.h.b16 %v582
  %v813 = vunpack.c.l.b16 %v583
  %v814 = vunpack.c.l.b16 %v584
  %v815 = vunpack.c.h.b16 %v584
  %v816 = vunpack.c.l.b16 %v585
  %v817 = vunpack.c.l.b16 %v586
  %v818 = vunpack.c.h.b16 %v586
  %v819 = vunpack.c.l.b16 %v587
  %v820 = vunpack.c.l.b16 %v588
  %v821 = vunpack.c.h.b16 %v588
  %v822 = vunpack.c.l.b16 %v589
  %v823 = vunpack.c.l.b16 %v590
  %v824 = vunpack.c.h.b16 %v590
  %v825 = vunpack.c.l.b16 %v591
  %v826 = vunpack.c.l.b16 %v592
  %v827 = vunpack.c.h.b16 %v592
  %v828 = vunpack.c.l.b16 %v593
  %v829 = vunpack.c.l.b16 %v594
  %v830 = vunpack.c.h.b16 %v594
  %v831 = vunpack.c.l.b16 %v595
  %v832 = vunpack.c.l.b16 %v596
  %v833 = vunpack.c.h.b16 %v596
  %v834 = vunpack.c.l.b16 %v597
  %v835 = vunpack.c.l.b16 %v598
  %v836 = vunpack.c.h.b16 %v598
  %v837 = vunpack.c.l.b16 %v599
  %v838 = vunpack.c.l.b16 %v600
  %v839 = vunpack.c.h.b16 %v600
  %v840 = vunpack.c.l.b16 %v601
  %v841 = vunpack.c.l.b16 %v602
  %v842 = vunpack.c.h.b16 %v602
  %v843 = vunpack.c.l.b16 %v603
  %v844 = vunpack.c.l.b16 %v604
  %v845 = vunpack.c.h.b16 %v604
  %v846 = vunpack.c.l.b16 %v605
  %v847 = vunpack.c.l.b16 %v606
  %v848 = vunpack.c.h.b16 %v606
  %v849 = vunpack.c.l.b16 %v607
  %v850 = vunpack.c.l.b16 %v608
  %v851 = vunpack.c.h.b16 %v608
  %v852 = vunpack.c.l.b16 %v609
  %v853 = vunpack.c.l.b16 %v610
  %v854 = vunpack.c.h.b16 %v610
  %v855 = vunpack.c.l.b16 %v611
  %v856 = vunpack.c.l.b16 %v612
  %v857 = vunpack.c.h.b16 %v612
  %v858 = vunpack.c.l.b16 %v613
  %v859 = vunpack.c.l.b16 %v614
  %v860 = vunpack.c.h.b16 %v614
  %v861 = vunpack.c.l.b16 %v615
  %v862 = vunpack.c.l.b16 %v616
  %v863 = vunpack.c.h.b16 %v616
  %v864 = vunpack.c.l.b16 %v617
  %v865 = vpack.c.b16 %v724, %v721
  %v866 = vpack.c.b16 %v725, %v722
  %v867 = vpack.c.b16 %v726, %v723
  %v868 = vpack.c.b16 %v730, %v727
  %v869 = vpack.c.b16 %v731, %v728
  %v870 = vpack.c.b16 %v732, %v729
  %v871 = vpack.c.b16 %v736, %v733
  %v872 = vpack.c.b16 %v737, %v734
  %v873 = vpack.c.b16 %v738, %v735
  %v874 = vpack.c.b16 %v742, %v739
  %v875 = vpack.c.b16 %v743, %v740
  %v876 = vpack.c.b16 %v744, %v741
  %v877 = vpack.c.b16 %v748, %v745
  %v878 = vpack.c.b16 %v749, %v746
  %v879 = vpack.c.b16 %v750, %v747
  %v880 = vpack.c.b16 %v754, %v751
  %v881 = vpack.c.b16 %v755, %v752
  %v882 = vpack.c.b16 %v756, %v753
  %v883 = vpack.c.b16 %v760, %v757
  %v884 = vpack.c.b16 %v761, %v758
  %v885 = vpack.c.b16 %v762, %v759
  %v886 = vpack.c.b16 %v766, %v763
  %v887 = vpack.c.b16 %v767, %v764
  %v888 = vpack.c.b16 %v768, %v765
  %v889 = vpack.c.b16 %v772, %v769
  %v890 = vpack.c.b16 %v773, %v770
  %v891 = vpack.c.b16 %v774, %v771
  %v892 = vpack.c.b16 %v778, %v775
  %v893 = vpack.c.b16 %v779, %v776
  %v894 = vpack.c.b16 %v780, %v777
  %v895 = vpack.c.b16 %v784, %v781
  %v896 = vpack.c.b16 %v785, %v782
  %v897 = vpack.c.b16 %v786, %v783
  %v898 = vpack.c.b16 %v790, %v787
  %v899 = vpack.c.b16 %v791, %v788
  %v900 = vpack.c.b16 %v792, %v789
  %v901 = vpack.c.b16 %v796, %v793
  %v902 = vpack.c.b16 %v797, %v794
  %v903 = vpack.c.b16 %v798, %v795
  %v904 = vpack.c.b16 %v802, %v799
  %v905 = vpack.c.b16 %v803, %v800
  %v906 = vpack.c.b16 %v804, %v801
  %v907 = vpack.c.b16 %v808, %v805
  %v908 = vpack.c.b16 %v809, %v806
  %v909 = vpack.c.b16 %v810, %v807
  %v910 = vpack.c.b16 %v814, %v811
  %v911 = vpack.c.b16 %v815, %v812
  %v912 = vpack.c.b16 %v816, %v813
  %v913 = vpack.c.b16 %v820, %v817
  %v914 = vpack.c.b16 %v821, %v818
  %v915 = vpack.c.b16 %v822, %v819
  %v916 = vpack.c.b16 %v826, %v823
  %v917 = vpack.c.b16 %v827, %v824
  %v918 = vpack.c.b16 %v828, %v825
  %v919 = vpack.c.b16 %v832, %v829
  %v920 = vpack.c.b16 %v833, %v830
  %v921 = vpack.c.b16 %v834, %v831
  %v922 = vpack.c.b16 %v838, %v835
  %v923 = vpack.c.b16 %v839, %v836
  %v924 = vpack.c.b16 %v840, %v837
  %v925 = vpack.c.b16 %v844, %v841
  %v926 = vpack.c.b16 %v845, %v842
  %v927 = vpack.c.b16 %v846, %v843
  %v928 = vpack.c.b16 %v850, %v847
  %v929 = vpack.c.b16 %v851, %v848
  %v930 = vpack.c.b16 %v852, %v849
  %v931 = vpack.c.b16 %v856, %v853
  %v932 = vpack.c.b16 %v857, %v854
  %v933 = vpack.c.b16 %v858, %v855
  %v934 = vpack.c.b16 %v862, %v859
  %v935 = vpack.c.b16 %v863, %v860
  %v936 = vpack.c.b16 %v864, %v861
  %1009 = vmatprep.subr.bf16.mxu0 0
  %1010 = vmatpush1.bf16.msra.mxu0 %v498
  %1011 = vmatprep.subr.bf16.mxu0 0
  %1012 = vmatpush1.bf16.msra.mxu0 %v499
  %1013 = vmatprep.subr.bf16.mxu0 0
  %1014 = vmatpush1.bf16.msra.mxu0 %v500
  %1015 = vmatprep.subr.bf16.mxu0 0
  %1016 = vmatpush1.bf16.msra.mxu0 %v501
  %1017 = vmatprep.subr.bf16.mxu0 0
  %1018 = vmatpush1.bf16.msra.mxu0 %v502
  %1019 = vmatprep.subr.bf16.mxu0 0
  %1020 = vmatpush1.bf16.msra.mxu0 %v503
  %1021 = vmatprep.subr.bf16.mxu0 0
  %1022 = vmatpush1.bf16.msra.mxu0 %v504
  %1023 = vmatprep.subr.bf16.mxu0 0
  %1024 = vmatpush1.bf16.msra.mxu0 %v505
  %1025 = vmatprep.subr.bf16.mxu0 0
  %1026 = vmatpush1.bf16.msra.mxu0 %v506
  %1027 = vmatprep.subr.bf16.mxu0 0
  %1028 = vmatpush1.bf16.msra.mxu0 %v507
  %1029 = vmatprep.subr.bf16.mxu0 0
  %1030 = vmatpush1.bf16.msra.mxu0 %v508
  %1031 = vmatprep.subr.bf16.mxu0 0
  %1032 = vmatpush1.bf16.msra.mxu0 %v509
  %1033 = vmatprep.subr.bf16.mxu0 0
  %1034 = vmatpush1.bf16.msra.mxu0 %v510
  %1035 = vmatprep.subr.bf16.mxu0 0
  %1036 = vmatpush1.bf16.msra.mxu0 %v511
  %1037 = vmatprep.subr.bf16.mxu0 0
  %1038 = vmatpush1.bf16.msra.mxu0 %v512
  %1039 = vmatprep.subr.bf16.mxu0 0
  %1040 = vmatpush1.bf16.msra.mxu0 %v513
  %1041 = vmatprep.mubr.bf16.mxu0 %v866
  %1042 = vmatmul.mubr.bf16.gmra.mrb[0].mxu0 %v865
  %v1043 = vpop.f32.mrb[0].mxu0
  %v1044 = vadd.f32 %v623, %v1043
  %v1045 = vpop.f32.mrb[0].mxu0
  %v1046 = vpop.f32.mrb[0].mxu0
  %v1047 = vadd.f32 %v623, %v1046
  %v1048 = vpop.f32.mrb[0].mxu0
  %1049 = vmatprep.mubr.bf16.mxu0 %v869
  %1050 = vmatmul.mubr.bf16.gmra.mrb[0].mxu0 %v868
  %v1051 = vpop.f32.mrb[0].mxu0
  %v1052 = vadd.f32 %v623, %v1051
  %v1053 = vpop.f32.mrb[0].mxu0
  %v1054 = vpop.f32.mrb[0].mxu0
  %v1055 = vadd.f32 %v623, %v1054
  %v1056 = vpop.f32.mrb[0].mxu0
  %1057 = vmatprep.mubr.bf16.mxu0 %v872
  %1058 = vmatmul.mubr.bf16.gmra.mrb[0].mxu0 %v871
  %v1059 = vpop.f32.mrb[0].mxu0
  %v1060 = vadd.f32 %v623, %v1059
  %v1061 = vpop.f32.mrb[0].mxu0
  %v1062 = vpop.f32.mrb[0].mxu0
  %v1063 = vadd.f32 %v623, %v1062
  %v1064 = vpop.f32.mrb[0].mxu0
  %1065 = vmatprep.mubr.bf16.mxu0 %v875
  %1066 = vmatmul.mubr.bf16.gmra.mrb[0].mxu0 %v874
  %v1067 = vpop.f32.mrb[0].mxu0
  %v1068 = vadd.f32 %v623, %v1067
  %v1069 = vpop.f32.mrb[0].mxu0
  %v1070 = vpop.f32.mrb[0].mxu0
  %v1071 = vadd.f32 %v623, %v1070
  %v1072 = vpop.f32.mrb[0].mxu0
  %1073 = vmatprep.mubr.bf16.mxu0 %v878
  %1074 = vmatmul.mubr.bf16.gmra.mrb[0].mxu0 %v877
  %v1075 = vpop.f32.mrb[0].mxu0
  %v1076 = vadd.f32 %v623, %v1075
  %v1077 = vpop.f32.mrb[0].mxu0
  %v1078 = vpop.f32.mrb[0].mxu0
  %v1079 = vadd.f32 %v623, %v1078
  %v1080 = vpop.f32.mrb[0].mxu0
  %1081 = vmatprep.mubr.bf16.mxu0 %v881
  %1082 = vmatmul.mubr.bf16.gmra.mrb[0].mxu0 %v880
  %v1083 = vpop.f32.mrb[0].mxu0
  %v1084 = vadd.f32 %v623, %v1083
  %v1085 = vpop.f32.mrb[0].mxu0
  %v1086 = vpop.f32.mrb[0].mxu0
  %v1087 = vadd.f32 %v623, %v1086
  %v1088 = vpop.f32.mrb[0].mxu0
  %1089 = vmatprep.mubr.bf16.mxu0 %v884
  %1090 = vmatmul.mubr.bf16.gmra.mrb[0].mxu0 %v883
  %v1091 = vpop.f32.mrb[0].mxu0
  %v1092 = vadd.f32 %v623, %v1091
  %v1093 = vpop.f32.mrb[0].mxu0
  %v1094 = vpop.f32.mrb[0].mxu0
  %v1095 = vadd.f32 %v623, %v1094
  %v1096 = vpop.f32.mrb[0].mxu0
  %1097 = vmatprep.mubr.bf16.mxu0 %v887
  %1098 = vmatmul.mubr.bf16.gmra.mrb[0].mxu0 %v886
  %v1099 = vpop.f32.mrb[0].mxu0
  %v1100 = vadd.f32 %v623, %v1099
  %v1101 = vpop.f32.mrb[0].mxu0
  %v1102 = vpop.f32.mrb[0].mxu0
  %v1103 = vadd.f32 %v623, %v1102
  %v1104 = vpop.f32.mrb[0].mxu0
  %1105 = vmatprep.mubr.bf16.mxu0 %v890
  %1106 = vmatmul.mubr.bf16.gmra.mrb[0].mxu0 %v889
  %v1107 = vpop.f32.mrb[0].mxu0
  %v1108 = vadd.f32 %v623, %v1107
  %v1109 = vpop.f32.mrb[0].mxu0
  %v1110 = vpop.f32.mrb[0].mxu0
  %v1111 = vadd.f32 %v623, %v1110
  %v1112 = vpop.f32.mrb[0].mxu0
  %1113 = vmatprep.mubr.bf16.mxu0 %v893
  %1114 = vmatmul.mubr.bf16.gmra.mrb[0].mxu0 %v892
  %v1115 = vpop.f32.mrb[0].mxu0
  %v1116 = vadd.f32 %v623, %v1115
  %v1117 = vpop.f32.mrb[0].mxu0
  %v1118 = vpop.f32.mrb[0].mxu0
  %v1119 = vadd.f32 %v623, %v1118
  %v1120 = vpop.f32.mrb[0].mxu0
  %1121 = vmatprep.mubr.bf16.mxu0 %v896
  %1122 = vmatmul.mubr.bf16.gmra.mrb[0].mxu0 %v895
  %v1123 = vpop.f32.mrb[0].mxu0
  %v1124 = vadd.f32 %v623, %v1123
  %v1125 = vpop.f32.mrb[0].mxu0
  %v1126 = vpop.f32.mrb[0].mxu0
  %v1127 = vadd.f32 %v623, %v1126
  %v1128 = vpop.f32.mrb[0].mxu0
  %1129 = vmatprep.mubr.bf16.mxu0 %v899
  %1130 = vmatmul.mubr.bf16.gmra.mrb[0].mxu0 %v898
  %v1131 = vpop.f32.mrb[0].mxu0
  %v1132 = vadd.f32 %v623, %v1131
  %v1133 = vpop.f32.mrb[0].mxu0
  %v1134 = vpop.f32.mrb[0].mxu0
  %v1135 = vadd.f32 %v623, %v1134
  %v1136 = vpop.f32.mrb[0].mxu0
  %1137 = vmatprep.mubr.bf16.mxu0 %v902
  %1138 = vmatmul.mubr.bf16.gmra.mrb[0].mxu0 %v901
  %v1139 = vpop.f32.mrb[0].mxu0
  %v1140 = vadd.f32 %v623, %v1139
  %v1141 = vpop.f32.mrb[0].mxu0
  %v1142 = vpop.f32.mrb[0].mxu0
  %v1143 = vadd.f32 %v623, %v1142
  %v1144 = vpop.f32.mrb[0].mxu0
  %1145 = vmatprep.mubr.bf16.mxu0 %v905
  %1146 = vmatmul.mubr.bf16.gmra.mrb[0].mxu0 %v904
  %v1147 = vpop.f32.mrb[0].mxu0
  %v1148 = vadd.f32 %v623, %v1147
  %v1149 = vpop.f32.mrb[0].mxu0
  %v1150 = vpop.f32.mrb[0].mxu0
  %v1151 = vadd.f32 %v623, %v1150
  %v1152 = vpop.f32.mrb[0].mxu0
  %1153 = vmatprep.mubr.bf16.mxu0 %v908
  %1154 = vmatmul.mubr.bf16.gmra.mrb[0].mxu0 %v907
  %v1155 = vpop.f32.mrb[0].mxu0
  %v1156 = vadd.f32 %v623, %v1155
  %v1157 = vpop.f32.mrb[0].mxu0
  %v1158 = vpop.f32.mrb[0].mxu0
  %v1159 = vadd.f32 %v623, %v1158
  %v1160 = vpop.f32.mrb[0].mxu0
  %1161 = vmatprep.mubr.bf16.mxu0 %v911
  %1162 = vmatmul.mubr.bf16.gmra.mrb[0].mxu0 %v910
  %v1163 = vpop.f32.mrb[0].mxu0
  %v1164 = vadd.f32 %v623, %v1163
  %v1165 = vpop.f32.mrb[0].mxu0
  %v1166 = vpop.f32.mrb[0].mxu0
  %v1167 = vadd.f32 %v623, %v1166
  %v1168 = vpop.f32.mrb[0].mxu0
  %1169 = vmatprep.mubr.bf16.mxu0 %v914
  %1170 = vmatmul.mubr.bf16.gmra.mrb[0].mxu0 %v913
  %v1171 = vpop.f32.mrb[0].mxu0
  %v1172 = vadd.f32 %v623, %v1171
  %v1173 = vpop.f32.mrb[0].mxu0
  %v1174 = vpop.f32.mrb[0].mxu0
  %v1175 = vadd.f32 %v623, %v1174
  %v1176 = vpop.f32.mrb[0].mxu0
  %1177 = vmatprep.mubr.bf16.mxu0 %v917
  %1178 = vmatmul.mubr.bf16.gmra.mrb[0].mxu0 %v916
  %v1179 = vpop.f32.mrb[0].mxu0
  %v1180 = vadd.f32 %v623, %v1179
  %v1181 = vpop.f32.mrb[0].mxu0
  %v1182 = vpop.f32.mrb[0].mxu0
  %v1183 = vadd.f32 %v623, %v1182
  %v1184 = vpop.f32.mrb[0].mxu0
  %1185 = vmatprep.mubr.bf16.mxu0 %v920
  %1186 = vmatmul.mubr.bf16.gmra.mrb[0].mxu0 %v919
  %v1187 = vpop.f32.mrb[0].mxu0
  %v1188 = vadd.f32 %v623, %v1187
  %v1189 = vpop.f32.mrb[0].mxu0
  %v1190 = vpop.f32.mrb[0].mxu0
  %v1191 = vadd.f32 %v623, %v1190
  %v1192 = vpop.f32.mrb[0].mxu0
  %1193 = vmatprep.mubr.bf16.mxu0 %v923
  %1194 = vmatmul.mubr.bf16.gmra.mrb[0].mxu0 %v922
  %v1195 = vpop.f32.mrb[0].mxu0
  %v1196 = vadd.f32 %v623, %v1195
  %v1197 = vpop.f32.mrb[0].mxu0
  %v1198 = vpop.f32.mrb[0].mxu0
  %v1199 = vadd.f32 %v623, %v1198
  %v1200 = vpop.f32.mrb[0].mxu0
  %1201 = vmatprep.mubr.bf16.mxu0 %v926
  %1202 = vmatmul.mubr.bf16.gmra.mrb[0].mxu0 %v925
  %v1203 = vpop.f32.mrb[0].mxu0
  %v1204 = vadd.f32 %v623, %v1203
  %v1205 = vpop.f32.mrb[0].mxu0
  %v1206 = vpop.f32.mrb[0].mxu0
  %v1207 = vadd.f32 %v623, %v1206
  %v1208 = vpop.f32.mrb[0].mxu0
  %1209 = vmatprep.mubr.bf16.mxu0 %v929
  %1210 = vmatmul.mubr.bf16.gmra.mrb[0].mxu0 %v928
  %v1211 = vpop.f32.mrb[0].mxu0
  %v1212 = vadd.f32 %v623, %v1211
  %v1213 = vpop.f32.mrb[0].mxu0
  %v1214 = vpop.f32.mrb[0].mxu0
  %v1215 = vadd.f32 %v623, %v1214
  %v1216 = vpop.f32.mrb[0].mxu0
  %1217 = vmatprep.mubr.bf16.mxu0 %v932
  %1218 = vmatmul.mubr.bf16.gmra.mrb[0].mxu0 %v931
  %v1219 = vpop.f32.mrb[0].mxu0
  %v1220 = vadd.f32 %v623, %v1219
  %v1221 = vpop.f32.mrb[0].mxu0
  %v1222 = vpop.f32.mrb[0].mxu0
  %v1223 = vadd.f32 %v623, %v1222
  %v1224 = vpop.f32.mrb[0].mxu0
  %1225 = vmatprep.mubr.bf16.mxu0 %v935
  %1226 = vmatmul.mubr.bf16.gmra.mrb[0].mxu0 %v934
  %v1227 = vpop.f32.mrb[0].mxu0
  %v1228 = vadd.f32 %v623, %v1227
  %v1229 = vpop.f32.mrb[0].mxu0
  %v1230 = vpop.f32.mrb[0].mxu0
  %v1231 = vadd.f32 %v623, %v1230
  %v1232 = vpop.f32.mrb[0].mxu0
  %1233 = vdwg.mxu0
  %1234 = vmatprep.subr.bf16.mxu0 0
  %1235 = vmatpush1.bf16.msra.mxu0 %v514
  %1236 = vmatprep.subr.bf16.mxu0 0
  %1237 = vmatpush1.bf16.msra.mxu0 %v515
  %1238 = vmatprep.subr.bf16.mxu0 0
  %1239 = vmatpush1.bf16.msra.mxu0 %v516
  %1240 = vmatprep.subr.bf16.mxu0 0
  %1241 = vmatpush1.bf16.msra.mxu0 %v517
  %1242 = vmatprep.subr.bf16.mxu0 0
  %1243 = vmatpush1.bf16.msra.mxu0 %v518
  %1244 = vmatprep.subr.bf16.mxu0 0
  %1245 = vmatpush1.bf16.msra.mxu0 %v519
  %1246 = vmatprep.subr.bf16.mxu0 0
  %1247 = vmatpush1.bf16.msra.mxu0 %v520
  %1248 = vmatprep.subr.bf16.mxu0 0
  %1249 = vmatpush1.bf16.msra.mxu0 %v521
  %1250 = vmatprep.subr.bf16.mxu0 0
  %1251 = vmatpush1.bf16.msra.mxu0 0
  %1252 = vmatprep.subr.bf16.mxu0 0
  %1253 = vmatpush1.bf16.msra.mxu0 0
  %1254 = vmatprep.subr.bf16.mxu0 0
  %1255 = vmatpush1.bf16.msra.mxu0 0
  %1256 = vmatprep.subr.bf16.mxu0 0
  %1257 = vmatpush1.bf16.msra.mxu0 0
  %1258 = vmatprep.subr.bf16.mxu0 0
  %1259 = vmatpush1.bf16.msra.mxu0 0
  %1260 = vmatprep.subr.bf16.mxu0 0
  %1261 = vmatpush1.bf16.msra.mxu0 0
  %1262 = vmatprep.subr.bf16.mxu0 0
  %1263 = vmatpush1.bf16.msra.mxu0 0
  %1264 = vmatprep.subr.bf16.mxu0 0
  %1265 = vmatpush1.bf16.msra.mxu0 0
  %1266 = vmatprep.mubr.bf16.mxu0 0
  %1267 = vmatmul.mubr.bf16.gmra.mrb[0].mxu0 %v867
  %v1268 = vpop.f32.mrb[0].mxu0
  %v1269 = vadd.f32 %v1044, %v1268
  %v1270 = vpop.f32.mrb[0].mxu0
  %v1271 = vpop.f32.mrb[0].mxu0
  %v1272 = vadd.f32 %v1047, %v1271
  %v1273 = vpop.f32.mrb[0].mxu0
  %1274 = vmatprep.mubr.bf16.mxu0 0
  %1275 = vmatmul.mubr.bf16.gmra.mrb[0].mxu0 %v870
  %v1276 = vpop.f32.mrb[0].mxu0
  %v1277 = vadd.f32 %v1052, %v1276
  %v1278 = vpop.f32.mrb[0].mxu0
  %v1279 = vpop.f32.mrb[0].mxu0
  %v1280 = vadd.f32 %v1055, %v1279
  %v1281 = vpop.f32.mrb[0].mxu0
  %1282 = vmatprep.mubr.bf16.mxu0 0
  %1283 = vmatmul.mubr.bf16.gmra.mrb[0].mxu0 %v873
  %v1284 = vpop.f32.mrb[0].mxu0
  %v1285 = vadd.f32 %v1060, %v1284
  %v1286 = vpop.f32.mrb[0].mxu0
  %v1287 = vpop.f32.mrb[0].mxu0
  %v1288 = vadd.f32 %v1063, %v1287
  %v1289 = vpop.f32.mrb[0].mxu0
  %1290 = vmatprep.mubr.bf16.mxu0 0
  %1291 = vmatmul.mubr.bf16.gmra.mrb[0].mxu0 %v876
  %v1292 = vpop.f32.mrb[0].mxu0
  %v1293 = vadd.f32 %v1068, %v1292
  %v1294 = vpop.f32.mrb[0].mxu0
  %v1295 = vpop.f32.mrb[0].mxu0
  %v1296 = vadd.f32 %v1071, %v1295
  %v1297 = vpop.f32.mrb[0].mxu0
  %1298 = vmatprep.mubr.bf16.mxu0 0
  %1299 = vmatmul.mubr.bf16.gmra.mrb[0].mxu0 %v879
  %v1300 = vpop.f32.mrb[0].mxu0
  %v1301 = vadd.f32 %v1076, %v1300
  %v1302 = vpop.f32.mrb[0].mxu0
  %v1303 = vpop.f32.mrb[0].mxu0
  %v1304 = vadd.f32 %v1079, %v1303
  %v1305 = vpop.f32.mrb[0].mxu0
  %1306 = vmatprep.mubr.bf16.mxu0 0
  %1307 = vmatmul.mubr.bf16.gmra.mrb[0].mxu0 %v882
  %v1308 = vpop.f32.mrb[0].mxu0
  %v1309 = vadd.f32 %v1084, %v1308
  %v1310 = vpop.f32.mrb[0].mxu0
  %v1311 = vpop.f32.mrb[0].mxu0
  %v1312 = vadd.f32 %v1087, %v1311
  %v1313 = vpop.f32.mrb[0].mxu0
  %1314 = vmatprep.mubr.bf16.mxu0 0
  %1315 = vmatmul.mubr.bf16.gmra.mrb[0].mxu0 %v885
  %v1316 = vpop.f32.mrb[0].mxu0
  %v1317 = vadd.f32 %v1092, %v1316
  %v1318 = vpop.f32.mrb[0].mxu0
  %v1319 = vpop.f32.mrb[0].mxu0
  %v1320 = vadd.f32 %v1095, %v1319
  %v1321 = vpop.f32.mrb[0].mxu0
  %1322 = vmatprep.mubr.bf16.mxu0 0
  %1323 = vmatmul.mubr.bf16.gmra.mrb[0].mxu0 %v888
  %v1324 = vpop.f32.mrb[0].mxu0
  %v1325 = vadd.f32 %v1100, %v1324
  %v1326 = vpop.f32.mrb[0].mxu0
  %v1327 = vpop.f32.mrb[0].mxu0
  %v1328 = vadd.f32 %v1103, %v1327
  %v1329 = vpop.f32.mrb[0].mxu0
  %1330 = vmatprep.mubr.bf16.mxu0 0
  %1331 = vmatmul.mubr.bf16.gmra.mrb[0].mxu0 %v891
  %v1332 = vpop.f32.mrb[0].mxu0
  %v1333 = vadd.f32 %v1108, %v1332
  %v1334 = vpop.f32.mrb[0].mxu0
  %v1335 = vpop.f32.mrb[0].mxu0
  %v1336 = vadd.f32 %v1111, %v1335
  %v1337 = vpop.f32.mrb[0].mxu0
  %1338 = vmatprep.mubr.bf16.mxu0 0
  %1339 = vmatmul.mubr.bf16.gmra.mrb[0].mxu0 %v894
  %v1340 = vpop.f32.mrb[0].mxu0
  %v1341 = vadd.f32 %v1116, %v1340
  %v1342 = vpop.f32.mrb[0].mxu0
  %v1343 = vpop.f32.mrb[0].mxu0
  %v1344 = vadd.f32 %v1119, %v1343
  %v1345 = vpop.f32.mrb[0].mxu0
  %1346 = vmatprep.mubr.bf16.mxu0 0
  %1347 = vmatmul.mubr.bf16.gmra.mrb[0].mxu0 %v897
  %v1348 = vpop.f32.mrb[0].mxu0
  %v1349 = vadd.f32 %v1124, %v1348
  %v1350 = vpop.f32.mrb[0].mxu0
  %v1351 = vpop.f32.mrb[0].mxu0
  %v1352 = vadd.f32 %v1127, %v1351
  %v1353 = vpop.f32.mrb[0].mxu0
  %1354 = vmatprep.mubr.bf16.mxu0 0
  %1355 = vmatmul.mubr.bf16.gmra.mrb[0].mxu0 %v900
  %v1356 = vpop.f32.mrb[0].mxu0
  %v1357 = vadd.f32 %v1132, %v1356
  %v1358 = vpop.f32.mrb[0].mxu0
  %v1359 = vpop.f32.mrb[0].mxu0
  %v1360 = vadd.f32 %v1135, %v1359
  %v1361 = vpop.f32.mrb[0].mxu0
  %1362 = vmatprep.mubr.bf16.mxu0 0
  %1363 = vmatmul.mubr.bf16.gmra.mrb[0].mxu0 %v903
  %v1364 = vpop.f32.mrb[0].mxu0
  %v1365 = vadd.f32 %v1140, %v1364
  %v1366 = vpop.f32.mrb[0].mxu0
  %v1367 = vpop.f32.mrb[0].mxu0
  %v1368 = vadd.f32 %v1143, %v1367
  %v1369 = vpop.f32.mrb[0].mxu0
  %1370 = vmatprep.mubr.bf16.mxu0 0
  %1371 = vmatmul.mubr.bf16.gmra.mrb[0].mxu0 %v906
  %v1372 = vpop.f32.mrb[0].mxu0
  %v1373 = vadd.f32 %v1148, %v1372
  %v1374 = vpop.f32.mrb[0].mxu0
  %v1375 = vpop.f32.mrb[0].mxu0
  %v1376 = vadd.f32 %v1151, %v1375
  %v1377 = vpop.f32.mrb[0].mxu0
  %1378 = vmatprep.mubr.bf16.mxu0 0
  %1379 = vmatmul.mubr.bf16.gmra.mrb[0].mxu0 %v909
  %v1380 = vpop.f32.mrb[0].mxu0
  %v1381 = vadd.f32 %v1156, %v1380
  %v1382 = vpop.f32.mrb[0].mxu0
  %v1383 = vpop.f32.mrb[0].mxu0
  %v1384 = vadd.f32 %v1159, %v1383
  %v1385 = vpop.f32.mrb[0].mxu0
  %1386 = vmatprep.mubr.bf16.mxu0 0
  %1387 = vmatmul.mubr.bf16.gmra.mrb[0].mxu0 %v912
  %v1388 = vpop.f32.mrb[0].mxu0
  %v1389 = vadd.f32 %v1164, %v1388
  %v1390 = vpop.f32.mrb[0].mxu0
  %v1391 = vpop.f32.mrb[0].mxu0
  %v1392 = vadd.f32 %v1167, %v1391
  %v1393 = vpop.f32.mrb[0].mxu0
  %1394 = vmatprep.mubr.bf16.mxu0 0
  %1395 = vmatmul.mubr.bf16.gmra.mrb[0].mxu0 %v915
  %v1396 = vpop.f32.mrb[0].mxu0
  %v1397 = vadd.f32 %v1172, %v1396
  %v1398 = vpop.f32.mrb[0].mxu0
  %v1399 = vpop.f32.mrb[0].mxu0
  %v1400 = vadd.f32 %v1175, %v1399
  %v1401 = vpop.f32.mrb[0].mxu0
  %1402 = vmatprep.mubr.bf16.mxu0 0
  %1403 = vmatmul.mubr.bf16.gmra.mrb[0].mxu0 %v918
  %v1404 = vpop.f32.mrb[0].mxu0
  %v1405 = vadd.f32 %v1180, %v1404
  %v1406 = vpop.f32.mrb[0].mxu0
  %v1407 = vpop.f32.mrb[0].mxu0
  %v1408 = vadd.f32 %v1183, %v1407
  %v1409 = vpop.f32.mrb[0].mxu0
  %1410 = vmatprep.mubr.bf16.mxu0 0
  %1411 = vmatmul.mubr.bf16.gmra.mrb[0].mxu0 %v921
  %v1412 = vpop.f32.mrb[0].mxu0
  %v1413 = vadd.f32 %v1188, %v1412
  %v1414 = vpop.f32.mrb[0].mxu0
  %v1415 = vpop.f32.mrb[0].mxu0
  %v1416 = vadd.f32 %v1191, %v1415
  %v1417 = vpop.f32.mrb[0].mxu0
  %1418 = vmatprep.mubr.bf16.mxu0 0
  %1419 = vmatmul.mubr.bf16.gmra.mrb[0].mxu0 %v924
  %v1420 = vpop.f32.mrb[0].mxu0
  %v1421 = vadd.f32 %v1196, %v1420
  %v1422 = vpop.f32.mrb[0].mxu0
  %v1423 = vpop.f32.mrb[0].mxu0
  %v1424 = vadd.f32 %v1199, %v1423
  %v1425 = vpop.f32.mrb[0].mxu0
  %1426 = vmatprep.mubr.bf16.mxu0 0
  %1427 = vmatmul.mubr.bf16.gmra.mrb[0].mxu0 %v927
  %v1428 = vpop.f32.mrb[0].mxu0
  %v1429 = vadd.f32 %v1204, %v1428
  %v1430 = vpop.f32.mrb[0].mxu0
  %v1431 = vpop.f32.mrb[0].mxu0
  %v1432 = vadd.f32 %v1207, %v1431
  %v1433 = vpop.f32.mrb[0].mxu0
  %1434 = vmatprep.mubr.bf16.mxu0 0
  %1435 = vmatmul.mubr.bf16.gmra.mrb[0].mxu0 %v930
  %v1436 = vpop.f32.mrb[0].mxu0
  %v1437 = vadd.f32 %v1212, %v1436
  %v1438 = vpop.f32.mrb[0].mxu0
  %v1439 = vpop.f32.mrb[0].mxu0
  %v1440 = vadd.f32 %v1215, %v1439
  %v1441 = vpop.f32.mrb[0].mxu0
  %1442 = vmatprep.mubr.bf16.mxu0 0
  %1443 = vmatmul.mubr.bf16.gmra.mrb[0].mxu0 %v933
  %v1444 = vpop.f32.mrb[0].mxu0
  %v1445 = vadd.f32 %v1220, %v1444
  %v1446 = vpop.f32.mrb[0].mxu0
  %v1447 = vpop.f32.mrb[0].mxu0
  %v1448 = vadd.f32 %v1223, %v1447
  %v1449 = vpop.f32.mrb[0].mxu0
  %1450 = vmatprep.mubr.bf16.mxu0 0
  %1451 = vmatmul.mubr.bf16.gmra.mrb[0].mxu0 %v936
  %v1452 = vpop.f32.mrb[0].mxu0
  %v1453 = vadd.f32 %v1228, %v1452
  %v1454 = vpop.f32.mrb[0].mxu0
  %v1455 = vpop.f32.mrb[0].mxu0
  %v1456 = vadd.f32 %v1231, %v1455
  %v1457 = vpop.f32.mrb[0].mxu0
  %1458 = vdwg.mxu0
  %v1459 = vmax.f32 %v1269, 0.0
  %v1460 = vmax.f32 %v1272, 0.0
  %v1461 = vmax.f32 %v1277, 0.0
  %v1462 = vmax.f32 %v1280, 0.0
  %v1463 = vmax.f32 %v1285, 0.0
  %v1464 = vmax.f32 %v1288, 0.0
  %v1465 = vmax.f32 %v1293, 0.0
  %v1466 = vmax.f32 %v1296, 0.0
  %v1467 = vmax.f32 %v1301, 0.0
  %v1468 = vmax.f32 %v1304, 0.0
  %v1469 = vmax.f32 %v1309, 0.0
  %v1470 = vmax.f32 %v1312, 0.0
  %v1471 = vmax.f32 %v1317, 0.0
  %v1472 = vmax.f32 %v1320, 0.0
  %v1473 = vmax.f32 %v1325, 0.0
  %v1474 = vmax.f32 %v1328, 0.0
  %v1475 = vmax.f32 %v1333, 0.0
  %v1476 = vmax.f32 %v1336, 0.0
  %v1477 = vmax.f32 %v1341, 0.0
  %v1478 = vmax.f32 %v1344, 0.0
  %v1479 = vmax.f32 %v1349, 0.0
  %v1480 = vmax.f32 %v1352, 0.0
  %v1481 = vmax.f32 %v1357, 0.0
  %v1482 = vmax.f32 %v1360, 0.0
  %v1483 = vmax.f32 %v1365, 0.0
  %v1484 = vmax.f32 %v1368, 0.0
  %v1485 = vmax.f32 %v1373, 0.0
  %v1486 = vmax.f32 %v1376, 0.0
  %v1487 = vmax.f32 %v1381, 0.0
  %v1488 = vmax.f32 %v1384, 0.0
  %v1489 = vmax.f32 %v1389, 0.0
  %v1490 = vmax.f32 %v1392, 0.0
  %v1491 = vmax.f32 %v1397, 0.0
  %v1492 = vmax.f32 %v1400, 0.0
  %v1493 = vmax.f32 %v1405, 0.0
  %v1494 = vmax.f32 %v1408, 0.0
  %v1495 = vmax.f32 %v1413, 0.0
  %v1496 = vmax.f32 %v1416, 0.0
  %v1497 = vmax.f32 %v1421, 0.0
  %v1498 = vmax.f32 %v1424, 0.0
  %v1499 = vmax.f32 %v1429, 0.0
  %v1500 = vmax.f32 %v1432, 0.0
  %v1501 = vmax.f32 %v1437, 0.0
  %v1502 = vmax.f32 %v1440, 0.0
  %v1503 = vmax.f32 %v1445, 0.0
  %v1504 = vmax.f32 %v1448, 0.0
  %v1505 = vmax.f32 %v1453, 0.0
  %v1506 = vmax.f32 %v1456, 0.0
  %v1507 = vpack.c.bf16 %v1460, %v1459
  %v1508 = vpack.c.bf16 %v1462, %v1461
  %v1509 = vpack.c.bf16 %v1464, %v1463
  %v1510 = vpack.c.bf16 %v1466, %v1465
  %v1511 = vpack.c.bf16 %v1468, %v1467
  %v1512 = vpack.c.bf16 %v1470, %v1469
  %v1513 = vpack.c.bf16 %v1472, %v1471
  %v1514 = vpack.c.bf16 %v1474, %v1473
  %v1515 = vpack.c.bf16 %v1476, %v1475
  %v1516 = vpack.c.bf16 %v1478, %v1477
  %v1517 = vpack.c.bf16 %v1480, %v1479
  %v1518 = vpack.c.bf16 %v1482, %v1481
  %v1519 = vpack.c.bf16 %v1484, %v1483
  %v1520 = vpack.c.bf16 %v1486, %v1485
  %v1521 = vpack.c.bf16 %v1488, %v1487
  %v1522 = vpack.c.bf16 %v1490, %v1489
  %v1523 = vpack.c.bf16 %v1492, %v1491
  %v1524 = vpack.c.bf16 %v1494, %v1493
  %v1525 = vpack.c.bf16 %v1496, %v1495
  %v1526 = vpack.c.bf16 %v1498, %v1497
  %v1527 = vpack.c.bf16 %v1500, %v1499
  %v1528 = vpack.c.bf16 %v1502, %v1501
  %v1529 = vpack.c.bf16 %v1504, %v1503
  %v1530 = vpack.c.bf16 %v1506, %v1505
  %v1531 = vld [vmem:[%s4] sm:$0xf]
  %v1532 = vld [vmem:[%s4 + $0x4] sm:$0xf]
  %v1533 = vld [vmem:[%s4 + $0x8] sm:$0xf]
  %v1534 = vld [vmem:[%s4 + $0xc] sm:$0xf]
  %v1535 = vld [vmem:[%s4 + $0x10] sm:$0xf]
  %v1536 = vld [vmem:[%s4 + $0x14] sm:$0xf]
  %v1537 = vld [vmem:[%s4 + $0x18] sm:$0xf]
  %v1538 = vld [vmem:[%s4 + $0x1c] sm:$0xf]
  %v1539 = vld [vmem:[%s4 + $0x20] sm:$0xf]
  %v1540 = vld [vmem:[%s4 + $0x24] sm:$0xf]
  %v1541 = vld [vmem:[%s4 + $0x28] sm:$0xf]
  %v1542 = vld [vmem:[%s4 + $0x2c] sm:$0xf]
  %v1543 = vld [vmem:[%s4 + $0x30] sm:$0xf]
  %v1544 = vld [vmem:[%s4 + $0x34] sm:$0xf]
  %v1545 = vld [vmem:[%s4 + $0x38] sm:$0xf]
  %v1546 = vld [vmem:[%s4 + $0x3c] sm:$0xf]
  %v1563 = vunpack.c.l.b16 %v1531
  %v1564 = vunpack.c.l.b16 %v1532
  %v1565 = vunpack.c.l.b16 %v1533
  %v1566 = vunpack.c.l.b16 %v1534
  %v1567 = vunpack.c.l.b16 %v1535
  %v1568 = vunpack.c.l.b16 %v1536
  %v1569 = vunpack.c.l.b16 %v1537
  %v1570 = vunpack.c.l.b16 %v1538
  %v1571 = vunpack.c.l.b16 %v1539
  %v1572 = vunpack.c.l.b16 %v1540
  %v1573 = vunpack.c.l.b16 %v1541
  %v1574 = vunpack.c.l.b16 %v1542
  %v1575 = vunpack.c.l.b16 %v1543
  %v1576 = vunpack.c.l.b16 %v1544
  %v1577 = vunpack.c.l.b16 %v1545
  %v1578 = vunpack.c.l.b16 %v1546
  %v1579 = vpack.c.b16 %v1564, %v1563
  %v1580 = vpack.c.b16 %v1566, %v1565
  %v1581 = vpack.c.b16 %v1568, %v1567
  %v1582 = vpack.c.b16 %v1570, %v1569
  %v1583 = vpack.c.b16 %v1572, %v1571
  %v1584 = vpack.c.b16 %v1574, %v1573
  %v1585 = vpack.c.b16 %v1576, %v1575
  %v1586 = vpack.c.b16 %v1578, %v1577
  %1595 = vmatprep.subr.bf16.mxu0 0
  %1596 = vmatpush1.bf16.msra.mxu0 %v1579
  %1597 = vmatprep.subr.bf16.mxu0 0
  %1598 = vmatpush1.bf16.msra.mxu0 %v1580
  %1599 = vmatprep.subr.bf16.mxu0 0
  %1600 = vmatpush1.bf16.msra.mxu0 %v1581
  %1601 = vmatprep.subr.bf16.mxu0 0
  %1602 = vmatpush1.bf16.msra.mxu0 %v1582
  %1603 = vmatprep.subr.bf16.mxu0 0
  %1604 = vmatpush1.bf16.msra.mxu0 %v1583
  %1605 = vmatprep.subr.bf16.mxu0 0
  %1606 = vmatpush1.bf16.msra.mxu0 %v1584
  %1607 = vmatprep.subr.bf16.mxu0 0
  %1608 = vmatpush1.bf16.msra.mxu0 %v1585
  %1609 = vmatprep.subr.bf16.mxu0 0
  %1610 = vmatpush1.bf16.msra.mxu0 %v1586
  %1611 = vmatprep.subr.bf16.mxu0 0
  %1612 = vmatpush1.bf16.msra.mxu0 0
  %1613 = vmatprep.subr.bf16.mxu0 0
  %1614 = vmatpush1.bf16.msra.mxu0 0
  %1615 = vmatprep.subr.bf16.mxu0 0
  %1616 = vmatpush1.bf16.msra.mxu0 0
  %1617 = vmatprep.subr.bf16.mxu0 0
  %1618 = vmatpush1.bf16.msra.mxu0 0
  %1619 = vmatprep.subr.bf16.mxu0 0
  %1620 = vmatpush1.bf16.msra.mxu0 0
  %1621 = vmatprep.subr.bf16.mxu0 0
  %1622 = vmatpush1.bf16.msra.mxu0 0
  %1623 = vmatprep.subr.bf16.mxu0 0
  %1624 = vmatpush1.bf16.msra.mxu0 0
  %1625 = vmatprep.subr.bf16.mxu0 0
  %1626 = vmatpush1.bf16.msra.mxu0 0
  %1627 = vmatprep.mubr.bf16.mxu0 0
  %1628 = vmatmul.mubr.bf16.gmra.mrb[0].mxu0 %v1507
  %v1629 = vpop.f32.mrb[0].mxu0
  %v1630 = vadd.f32 0.0, %v1629
  %v1631 = vpop.f32.mrb[0].mxu0
  %v1632 = vpop.f32.mrb[0].mxu0
  %v1633 = vadd.f32 0.0, %v1632
  %v1634 = vpop.f32.mrb[0].mxu0
  %1635 = vmatprep.mubr.bf16.mxu0 0
  %1636 = vmatmul.mubr.bf16.gmra.mrb[0].mxu0 %v1508
  %v1637 = vpop.f32.mrb[0].mxu0
  %v1638 = vadd.f32 0.0, %v1637
  %v1639 = vpop.f32.mrb[0].mxu0
  %v1640 = vpop.f32.mrb[0].mxu0
  %v1641 = vadd.f32 0.0, %v1640
  %v1642 = vpop.f32.mrb[0].mxu0
  %1643 = vmatprep.mubr.bf16.mxu0 0
  %1644 = vmatmul.mubr.bf16.gmra.mrb[0].mxu0 %v1509
  %v1645 = vpop.f32.mrb[0].mxu0
  %v1646 = vadd.f32 0.0, %v1645
  %v1647 = vpop.f32.mrb[0].mxu0
  %v1648 = vpop.f32.mrb[0].mxu0
  %v1649 = vadd.f32 0.0, %v1648
  %v1650 = vpop.f32.mrb[0].mxu0
  %1651 = vmatprep.mubr.bf16.mxu0 0
  %1652 = vmatmul.mubr.bf16.gmra.mrb[0].mxu0 %v1510
  %v1653 = vpop.f32.mrb[0].mxu0
  %v1654 = vadd.f32 0.0, %v1653
  %v1655 = vpop.f32.mrb[0].mxu0
  %v1656 = vpop.f32.mrb[0].mxu0
  %v1657 = vadd.f32 0.0, %v1656
  %v1658 = vpop.f32.mrb[0].mxu0
  %1659 = vmatprep.mubr.bf16.mxu0 0
  %1660 = vmatmul.mubr.bf16.gmra.mrb[0].mxu0 %v1511
  %v1661 = vpop.f32.mrb[0].mxu0
  %v1662 = vadd.f32 0.0, %v1661
  %v1663 = vpop.f32.mrb[0].mxu0
  %v1664 = vpop.f32.mrb[0].mxu0
  %v1665 = vadd.f32 0.0, %v1664
  %v1666 = vpop.f32.mrb[0].mxu0
  %1667 = vmatprep.mubr.bf16.mxu0 0
  %1668 = vmatmul.mubr.bf16.gmra.mrb[0].mxu0 %v1512
  %v1669 = vpop.f32.mrb[0].mxu0
  %v1670 = vadd.f32 0.0, %v1669
  %v1671 = vpop.f32.mrb[0].mxu0
  %v1672 = vpop.f32.mrb[0].mxu0
  %v1673 = vadd.f32 0.0, %v1672
  %v1674 = vpop.f32.mrb[0].mxu0
  %1675 = vmatprep.mubr.bf16.mxu0 0
  %1676 = vmatmul.mubr.bf16.gmra.mrb[0].mxu0 %v1513
  %v1677 = vpop.f32.mrb[0].mxu0
  %v1678 = vadd.f32 0.0, %v1677
  %v1679 = vpop.f32.mrb[0].mxu0
  %v1680 = vpop.f32.mrb[0].mxu0
  %v1681 = vadd.f32 0.0, %v1680
  %v1682 = vpop.f32.mrb[0].mxu0
  %1683 = vmatprep.mubr.bf16.mxu0 0
  %1684 = vmatmul.mubr.bf16.gmra.mrb[0].mxu0 %v1514
  %v1685 = vpop.f32.mrb[0].mxu0
  %v1686 = vadd.f32 0.0, %v1685
  %v1687 = vpop.f32.mrb[0].mxu0
  %v1688 = vpop.f32.mrb[0].mxu0
  %v1689 = vadd.f32 0.0, %v1688
  %v1690 = vpop.f32.mrb[0].mxu0
  %1691 = vmatprep.mubr.bf16.mxu0 0
  %1692 = vmatmul.mubr.bf16.gmra.mrb[0].mxu0 %v1515
  %v1693 = vpop.f32.mrb[0].mxu0
  %v1694 = vadd.f32 0.0, %v1693
  %v1695 = vpop.f32.mrb[0].mxu0
  %v1696 = vpop.f32.mrb[0].mxu0
  %v1697 = vadd.f32 0.0, %v1696
  %v1698 = vpop.f32.mrb[0].mxu0
  %1699 = vmatprep.mubr.bf16.mxu0 0
  %1700 = vmatmul.mubr.bf16.gmra.mrb[0].mxu0 %v1516
  %v1701 = vpop.f32.mrb[0].mxu0
  %v1702 = vadd.f32 0.0, %v1701
  %v1703 = vpop.f32.mrb[0].mxu0
  %v1704 = vpop.f32.mrb[0].mxu0
  %v1705 = vadd.f32 0.0, %v1704
  %v1706 = vpop.f32.mrb[0].mxu0
  %1707 = vmatprep.mubr.bf16.mxu0 0
  %1708 = vmatmul.mubr.bf16.gmra.mrb[0].mxu0 %v1517
  %v1709 = vpop.f32.mrb[0].mxu0
  %v1710 = vadd.f32 0.0, %v1709
  %v1711 = vpop.f32.mrb[0].mxu0
  %v1712 = vpop.f32.mrb[0].mxu0
  %v1713 = vadd.f32 0.0, %v1712
  %v1714 = vpop.f32.mrb[0].mxu0
  %1715 = vmatprep.mubr.bf16.mxu0 0
  %1716 = vmatmul.mubr.bf16.gmra.mrb[0].mxu0 %v1518
  %v1717 = vpop.f32.mrb[0].mxu0
  %v1718 = vadd.f32 0.0, %v1717
  %v1719 = vpop.f32.mrb[0].mxu0
  %v1720 = vpop.f32.mrb[0].mxu0
  %v1721 = vadd.f32 0.0, %v1720
  %v1722 = vpop.f32.mrb[0].mxu0
  %1723 = vmatprep.mubr.bf16.mxu0 0
  %1724 = vmatmul.mubr.bf16.gmra.mrb[0].mxu0 %v1519
  %v1725 = vpop.f32.mrb[0].mxu0
  %v1726 = vadd.f32 0.0, %v1725
  %v1727 = vpop.f32.mrb[0].mxu0
  %v1728 = vpop.f32.mrb[0].mxu0
  %v1729 = vadd.f32 0.0, %v1728
  %v1730 = vpop.f32.mrb[0].mxu0
  %1731 = vmatprep.mubr.bf16.mxu0 0
  %1732 = vmatmul.mubr.bf16.gmra.mrb[0].mxu0 %v1520
  %v1733 = vpop.f32.mrb[0].mxu0
  %v1734 = vadd.f32 0.0, %v1733
  %v1735 = vpop.f32.mrb[0].mxu0
  %v1736 = vpop.f32.mrb[0].mxu0
  %v1737 = vadd.f32 0.0, %v1736
  %v1738 = vpop.f32.mrb[0].mxu0
  %1739 = vmatprep.mubr.bf16.mxu0 0
  %1740 = vmatmul.mubr.bf16.gmra.mrb[0].mxu0 %v1521
  %v1741 = vpop.f32.mrb[0].mxu0
  %v1742 = vadd.f32 0.0, %v1741
  %v1743 = vpop.f32.mrb[0].mxu0
  %v1744 = vpop.f32.mrb[0].mxu0
  %v1745 = vadd.f32 0.0, %v1744
  %v1746 = vpop.f32.mrb[0].mxu0
  %1747 = vmatprep.mubr.bf16.mxu0 0
  %1748 = vmatmul.mubr.bf16.gmra.mrb[0].mxu0 %v1522
  %v1749 = vpop.f32.mrb[0].mxu0
  %v1750 = vadd.f32 0.0, %v1749
  %v1751 = vpop.f32.mrb[0].mxu0
  %v1752 = vpop.f32.mrb[0].mxu0
  %v1753 = vadd.f32 0.0, %v1752
  %v1754 = vpop.f32.mrb[0].mxu0
  %1755 = vmatprep.mubr.bf16.mxu0 0
  %1756 = vmatmul.mubr.bf16.gmra.mrb[0].mxu0 %v1523
  %v1757 = vpop.f32.mrb[0].mxu0
  %v1758 = vadd.f32 0.0, %v1757
  %v1759 = vpop.f32.mrb[0].mxu0
  %v1760 = vpop.f32.mrb[0].mxu0
  %v1761 = vadd.f32 0.0, %v1760
  %v1762 = vpop.f32.mrb[0].mxu0
  %1763 = vmatprep.mubr.bf16.mxu0 0
  %1764 = vmatmul.mubr.bf16.gmra.mrb[0].mxu0 %v1524
  %v1765 = vpop.f32.mrb[0].mxu0
  %v1766 = vadd.f32 0.0, %v1765
  %v1767 = vpop.f32.mrb[0].mxu0
  %v1768 = vpop.f32.mrb[0].mxu0
  %v1769 = vadd.f32 0.0, %v1768
  %v1770 = vpop.f32.mrb[0].mxu0
  %1771 = vmatprep.mubr.bf16.mxu0 0
  %1772 = vmatmul.mubr.bf16.gmra.mrb[0].mxu0 %v1525
  %v1773 = vpop.f32.mrb[0].mxu0
  %v1774 = vadd.f32 0.0, %v1773
  %v1775 = vpop.f32.mrb[0].mxu0
  %v1776 = vpop.f32.mrb[0].mxu0
  %v1777 = vadd.f32 0.0, %v1776
  %v1778 = vpop.f32.mrb[0].mxu0
  %1779 = vmatprep.mubr.bf16.mxu0 0
  %1780 = vmatmul.mubr.bf16.gmra.mrb[0].mxu0 %v1526
  %v1781 = vpop.f32.mrb[0].mxu0
  %v1782 = vadd.f32 0.0, %v1781
  %v1783 = vpop.f32.mrb[0].mxu0
  %v1784 = vpop.f32.mrb[0].mxu0
  %v1785 = vadd.f32 0.0, %v1784
  %v1786 = vpop.f32.mrb[0].mxu0
  %1787 = vmatprep.mubr.bf16.mxu0 0
  %1788 = vmatmul.mubr.bf16.gmra.mrb[0].mxu0 %v1527
  %v1789 = vpop.f32.mrb[0].mxu0
  %v1790 = vadd.f32 0.0, %v1789
  %v1791 = vpop.f32.mrb[0].mxu0
  %v1792 = vpop.f32.mrb[0].mxu0
  %v1793 = vadd.f32 0.0, %v1792
  %v1794 = vpop.f32.mrb[0].mxu0
  %1795 = vmatprep.mubr.bf16.mxu0 0
  %1796 = vmatmul.mubr.bf16.gmra.mrb[0].mxu0 %v1528
  %v1797 = vpop.f32.mrb[0].mxu0
  %v1798 = vadd.f32 0.0, %v1797
  %v1799 = vpop.f32.mrb[0].mxu0
  %v1800 = vpop.f32.mrb[0].mxu0
  %v1801 = vadd.f32 0.0, %v1800
  %v1802 = vpop.f32.mrb[0].mxu0
  %1803 = vmatprep.mubr.bf16.mxu0 0
  %1804 = vmatmul.mubr.bf16.gmra.mrb[0].mxu0 %v1529
  %v1805 = vpop.f32.mrb[0].mxu0
  %v1806 = vadd.f32 0.0, %v1805
  %v1807 = vpop.f32.mrb[0].mxu0
  %v1808 = vpop.f32.mrb[0].mxu0
  %v1809 = vadd.f32 0.0, %v1808
  %v1810 = vpop.f32.mrb[0].mxu0
  %1811 = vmatprep.mubr.bf16.mxu0 0
  %1812 = vmatmul.mubr.bf16.gmra.mrb[0].mxu0 %v1530
  %v1813 = vpop.f32.mrb[0].mxu0
  %v1814 = vadd.f32 0.0, %v1813
  %v1815 = vpop.f32.mrb[0].mxu0
  %v1816 = vpop.f32.mrb[0].mxu0
  %v1817 = vadd.f32 0.0, %v1816
  %v1818 = vpop.f32.mrb[0].mxu0
  %1819 = vdwg.mxu0
  %v1820 = vpack.c.bf16 %v1633, %v1630
  %v1821 = vpack.c.bf16 %v1641, %v1638
  %v1822 = vpack.c.bf16 %v1649, %v1646
  %v1823 = vpack.c.bf16 %v1657, %v1654
  %v1824 = vpack.c.bf16 %v1665, %v1662
  %v1825 = vpack.c.bf16 %v1673, %v1670
  %v1826 = vpack.c.bf16 %v1681, %v1678
  %v1827 = vpack.c.bf16 %v1689, %v1686
  %v1828 = vpack.c.bf16 %v1697, %v1694
  %v1829 = vpack.c.bf16 %v1705, %v1702
  %v1830 = vpack.c.bf16 %v1713, %v1710
  %v1831 = vpack.c.bf16 %v1721, %v1718
  %v1832 = vpack.c.bf16 %v1729, %v1726
  %v1833 = vpack.c.bf16 %v1737, %v1734
  %v1834 = vpack.c.bf16 %v1745, %v1742
  %v1835 = vpack.c.bf16 %v1753, %v1750
  %v1836 = vpack.c.bf16 %v1761, %v1758
  %v1837 = vpack.c.bf16 %v1769, %v1766
  %v1838 = vpack.c.bf16 %v1777, %v1774
  %v1839 = vpack.c.bf16 %v1785, %v1782
  %v1840 = vpack.c.bf16 %v1793, %v1790
  %v1841 = vpack.c.bf16 %v1801, %v1798
  %v1842 = vpack.c.bf16 %v1809, %v1806
  %v1843 = vpack.c.bf16 %v1817, %v1814
  %v1844 = vld [vmem:[%s5] sm:$0x1]
  %v1846 = vlaneseq
  %v1847 = vshrl.u32 %v1846, 7
  %v1848 = vsub.s32 0, %v1847
  %v1849 = vrot.slane %v1844, %v1848
  %1851 = vmatprep.subr.bf16.mxu0 0
  %1852 = vmatpush1.bf16.msra.mxu0 %v1820
  %1853 = vmatprep.subr.bf16.mxu0 0
  %1854 = vmatpush1.bf16.msra.mxu0 %v1821
  %1855 = vmatprep.subr.bf16.mxu0 0
  %1856 = vmatpush1.bf16.msra.mxu0 %v1822
  %1857 = vmatprep.subr.bf16.mxu0 0
  %1858 = vmatpush1.bf16.msra.mxu0 %v1823
  %1859 = vmatprep.subr.bf16.mxu0 0
  %1860 = vmatpush1.bf16.msra.mxu0 %v1824
  %1861 = vmatprep.subr.bf16.mxu0 0
  %1862 = vmatpush1.bf16.msra.mxu0 %v1825
  %1863 = vmatprep.subr.bf16.mxu0 0
  %1864 = vmatpush1.bf16.msra.mxu0 %v1826
  %1865 = vmatprep.subr.bf16.mxu0 0
  %1866 = vmatpush1.bf16.msra.mxu0 %v1827
  %1867 = vmatprep.subr.bf16.mxu0 0
  %1868 = vmatpush1.bf16.msra.mxu0 %v1828
  %1869 = vmatprep.subr.bf16.mxu0 0
  %1870 = vmatpush1.bf16.msra.mxu0 %v1829
  %1871 = vmatprep.subr.bf16.mxu0 0
  %1872 = vmatpush1.bf16.msra.mxu0 %v1830
  %1873 = vmatprep.subr.bf16.mxu0 0
  %1874 = vmatpush1.bf16.msra.mxu0 %v1831
  %1875 = vmatprep.subr.bf16.mxu0 0
  %1876 = vmatpush1.bf16.msra.mxu0 %v1832
  %1877 = vmatprep.subr.bf16.mxu0 0
  %1878 = vmatpush1.bf16.msra.mxu0 %v1833
  %1879 = vmatprep.subr.bf16.mxu0 0
  %1880 = vmatpush1.bf16.msra.mxu0 %v1834
  %1881 = vmatprep.subr.bf16.mxu0 0
  %1882 = vmatpush1.bf16.msra.mxu0 %v1835
  %1883 = vmatprep.mubr.bf16.mxu0 %v866
  %1884 = vmatmul.mubr.bf16.gmra.mrb[0].mxu0 %v865
  %v1885 = vpop.f32.mrb[0].mxu0
  %v1886 = vadd.f32 %v1849, %v1885
  %v1887 = vpop.f32.mrb[0].mxu0
  %v1888 = vpop.f32.mrb[0].mxu0
  %v1889 = vadd.f32 %v1849, %v1888
  %v1890 = vpop.f32.mrb[0].mxu0
  %1891 = vmatprep.mubr.bf16.mxu0 %v869
  %1892 = vmatmul.mubr.bf16.gmra.mrb[0].mxu0 %v868
  %v1893 = vpop.f32.mrb[0].mxu0
  %v1894 = vadd.f32 %v1849, %v1893
  %v1895 = vpop.f32.mrb[0].mxu0
  %v1896 = vpop.f32.mrb[0].mxu0
  %v1897 = vadd.f32 %v1849, %v1896
  %v1898 = vpop.f32.mrb[0].mxu0
  %1899 = vmatprep.mubr.bf16.mxu0 %v872
  %1900 = vmatmul.mubr.bf16.gmra.mrb[0].mxu0 %v871
  %v1901 = vpop.f32.mrb[0].mxu0
  %v1902 = vadd.f32 %v1849, %v1901
  %v1903 = vpop.f32.mrb[0].mxu0
  %v1904 = vpop.f32.mrb[0].mxu0
  %v1905 = vadd.f32 %v1849, %v1904
  %v1906 = vpop.f32.mrb[0].mxu0
  %1907 = vmatprep.mubr.bf16.mxu0 %v875
  %1908 = vmatmul.mubr.bf16.gmra.mrb[0].mxu0 %v874
  %v1909 = vpop.f32.mrb[0].mxu0
  %v1910 = vadd.f32 %v1849, %v1909
  %v1911 = vpop.f32.mrb[0].mxu0
  %v1912 = vpop.f32.mrb[0].mxu0
  %v1913 = vadd.f32 %v1849, %v1912
  %v1914 = vpop.f32.mrb[0].mxu0
  %1915 = vmatprep.mubr.bf16.mxu0 %v878
  %1916 = vmatmul.mubr.bf16.gmra.mrb[0].mxu0 %v877
  %v1917 = vpop.f32.mrb[0].mxu0
  %v1918 = vadd.f32 %v1849, %v1917
  %v1919 = vpop.f32.mrb[0].mxu0
  %v1920 = vpop.f32.mrb[0].mxu0
  %v1921 = vadd.f32 %v1849, %v1920
  %v1922 = vpop.f32.mrb[0].mxu0
  %1923 = vmatprep.mubr.bf16.mxu0 %v881
  %1924 = vmatmul.mubr.bf16.gmra.mrb[0].mxu0 %v880
  %v1925 = vpop.f32.mrb[0].mxu0
  %v1926 = vadd.f32 %v1849, %v1925
  %v1927 = vpop.f32.mrb[0].mxu0
  %v1928 = vpop.f32.mrb[0].mxu0
  %v1929 = vadd.f32 %v1849, %v1928
  %v1930 = vpop.f32.mrb[0].mxu0
  %1931 = vmatprep.mubr.bf16.mxu0 %v884
  %1932 = vmatmul.mubr.bf16.gmra.mrb[0].mxu0 %v883
  %v1933 = vpop.f32.mrb[0].mxu0
  %v1934 = vadd.f32 %v1849, %v1933
  %v1935 = vpop.f32.mrb[0].mxu0
  %v1936 = vpop.f32.mrb[0].mxu0
  %v1937 = vadd.f32 %v1849, %v1936
  %v1938 = vpop.f32.mrb[0].mxu0
  %1939 = vmatprep.mubr.bf16.mxu0 %v887
  %1940 = vmatmul.mubr.bf16.gmra.mrb[0].mxu0 %v886
  %v1941 = vpop.f32.mrb[0].mxu0
  %v1942 = vadd.f32 %v1849, %v1941
  %v1943 = vpop.f32.mrb[0].mxu0
  %v1944 = vpop.f32.mrb[0].mxu0
  %v1945 = vadd.f32 %v1849, %v1944
  %v1946 = vpop.f32.mrb[0].mxu0
  %1947 = vmatprep.mubr.bf16.mxu0 %v890
  %1948 = vmatmul.mubr.bf16.gmra.mrb[0].mxu0 %v889
  %v1949 = vpop.f32.mrb[0].mxu0
  %v1950 = vadd.f32 %v1849, %v1949
  %v1951 = vpop.f32.mrb[0].mxu0
  %v1952 = vpop.f32.mrb[0].mxu0
  %v1953 = vadd.f32 %v1849, %v1952
  %v1954 = vpop.f32.mrb[0].mxu0
  %1955 = vmatprep.mubr.bf16.mxu0 %v893
  %1956 = vmatmul.mubr.bf16.gmra.mrb[0].mxu0 %v892
  %v1957 = vpop.f32.mrb[0].mxu0
  %v1958 = vadd.f32 %v1849, %v1957
  %v1959 = vpop.f32.mrb[0].mxu0
  %v1960 = vpop.f32.mrb[0].mxu0
  %v1961 = vadd.f32 %v1849, %v1960
  %v1962 = vpop.f32.mrb[0].mxu0
  %1963 = vmatprep.mubr.bf16.mxu0 %v896
  %1964 = vmatmul.mubr.bf16.gmra.mrb[0].mxu0 %v895
  %v1965 = vpop.f32.mrb[0].mxu0
  %v1966 = vadd.f32 %v1849, %v1965
  %v1967 = vpop.f32.mrb[0].mxu0
  %v1968 = vpop.f32.mrb[0].mxu0
  %v1969 = vadd.f32 %v1849, %v1968
  %v1970 = vpop.f32.mrb[0].mxu0
  %1971 = vmatprep.mubr.bf16.mxu0 %v899
  %1972 = vmatmul.mubr.bf16.gmra.mrb[0].mxu0 %v898
  %v1973 = vpop.f32.mrb[0].mxu0
  %v1974 = vadd.f32 %v1849, %v1973
  %v1975 = vpop.f32.mrb[0].mxu0
  %v1976 = vpop.f32.mrb[0].mxu0
  %v1977 = vadd.f32 %v1849, %v1976
  %v1978 = vpop.f32.mrb[0].mxu0
  %1979 = vmatprep.mubr.bf16.mxu0 %v902
  %1980 = vmatmul.mubr.bf16.gmra.mrb[0].mxu0 %v901
  %v1981 = vpop.f32.mrb[0].mxu0
  %v1982 = vadd.f32 %v1849, %v1981
  %v1983 = vpop.f32.mrb[0].mxu0
  %v1984 = vpop.f32.mrb[0].mxu0
  %v1985 = vadd.f32 %v1849, %v1984
  %v1986 = vpop.f32.mrb[0].mxu0
  %1987 = vmatprep.mubr.bf16.mxu0 %v905
  %1988 = vmatmul.mubr.bf16.gmra.mrb[0].mxu0 %v904
  %v1989 = vpop.f32.mrb[0].mxu0
  %v1990 = vadd.f32 %v1849, %v1989
  %v1991 = vpop.f32.mrb[0].mxu0
  %v1992 = vpop.f32.mrb[0].mxu0
  %v1993 = vadd.f32 %v1849, %v1992
  %v1994 = vpop.f32.mrb[0].mxu0
  %1995 = vmatprep.mubr.bf16.mxu0 %v908
  %1996 = vmatmul.mubr.bf16.gmra.mrb[0].mxu0 %v907
  %v1997 = vpop.f32.mrb[0].mxu0
  %v1998 = vadd.f32 %v1849, %v1997
  %v1999 = vpop.f32.mrb[0].mxu0
  %v2000 = vpop.f32.mrb[0].mxu0
  %v2001 = vadd.f32 %v1849, %v2000
  %v2002 = vpop.f32.mrb[0].mxu0
  %2003 = vmatprep.mubr.bf16.mxu0 %v911
  %2004 = vmatmul.mubr.bf16.gmra.mrb[0].mxu0 %v910
  %v2005 = vpop.f32.mrb[0].mxu0
  %v2006 = vadd.f32 %v1849, %v2005
  %v2007 = vpop.f32.mrb[0].mxu0
  %v2008 = vpop.f32.mrb[0].mxu0
  %v2009 = vadd.f32 %v1849, %v2008
  %v2010 = vpop.f32.mrb[0].mxu0
  %2011 = vmatprep.mubr.bf16.mxu0 %v914
  %2012 = vmatmul.mubr.bf16.gmra.mrb[0].mxu0 %v913
  %v2013 = vpop.f32.mrb[0].mxu0
  %v2014 = vadd.f32 %v1849, %v2013
  %v2015 = vpop.f32.mrb[0].mxu0
  %v2016 = vpop.f32.mrb[0].mxu0
  %v2017 = vadd.f32 %v1849, %v2016
  %v2018 = vpop.f32.mrb[0].mxu0
  %2019 = vmatprep.mubr.bf16.mxu0 %v917
  %2020 = vmatmul.mubr.bf16.gmra.mrb[0].mxu0 %v916
  %v2021 = vpop.f32.mrb[0].mxu0
  %v2022 = vadd.f32 %v1849, %v2021
  %v2023 = vpop.f32.mrb[0].mxu0
  %v2024 = vpop.f32.mrb[0].mxu0
  %v2025 = vadd.f32 %v1849, %v2024
  %v2026 = vpop.f32.mrb[0].mxu0
  %2027 = vmatprep.mubr.bf16.mxu0 %v920
  %2028 = vmatmul.mubr.bf16.gmra.mrb[0].mxu0 %v919
  %v2029 = vpop.f32.mrb[0].mxu0
  %v2030 = vadd.f32 %v1849, %v2029
  %v2031 = vpop.f32.mrb[0].mxu0
  %v2032 = vpop.f32.mrb[0].mxu0
  %v2033 = vadd.f32 %v1849, %v2032
  %v2034 = vpop.f32.mrb[0].mxu0
  %2035 = vmatprep.mubr.bf16.mxu0 %v923
  %2036 = vmatmul.mubr.bf16.gmra.mrb[0].mxu0 %v922
  %v2037 = vpop.f32.mrb[0].mxu0
  %v2038 = vadd.f32 %v1849, %v2037
  %v2039 = vpop.f32.mrb[0].mxu0
  %v2040 = vpop.f32.mrb[0].mxu0
  %v2041 = vadd.f32 %v1849, %v2040
  %v2042 = vpop.f32.mrb[0].mxu0
  %2043 = vmatprep.mubr.bf16.mxu0 %v926
  %2044 = vmatmul.mubr.bf16.gmra.mrb[0].mxu0 %v925
  %v2045 = vpop.f32.mrb[0].mxu0
  %v2046 = vadd.f32 %v1849, %v2045
  %v2047 = vpop.f32.mrb[0].mxu0
  %v2048 = vpop.f32.mrb[0].mxu0
  %v2049 = vadd.f32 %v1849, %v2048
  %v2050 = vpop.f32.mrb[0].mxu0
  %2051 = vmatprep.mubr.bf16.mxu0 %v929
  %2052 = vmatmul.mubr.bf16.gmra.mrb[0].mxu0 %v928
  %v2053 = vpop.f32.mrb[0].mxu0
  %v2054 = vadd.f32 %v1849, %v2053
  %v2055 = vpop.f32.mrb[0].mxu0
  %v2056 = vpop.f32.mrb[0].mxu0
  %v2057 = vadd.f32 %v1849, %v2056
  %v2058 = vpop.f32.mrb[0].mxu0
  %2059 = vmatprep.mubr.bf16.mxu0 %v932
  %2060 = vmatmul.mubr.bf16.gmra.mrb[0].mxu0 %v931
  %v2061 = vpop.f32.mrb[0].mxu0
  %v2062 = vadd.f32 %v1849, %v2061
  %v2063 = vpop.f32.mrb[0].mxu0
  %v2064 = vpop.f32.mrb[0].mxu0
  %v2065 = vadd.f32 %v1849, %v2064
  %v2066 = vpop.f32.mrb[0].mxu0
  %2067 = vmatprep.mubr.bf16.mxu0 %v935
  %2068 = vmatmul.mubr.bf16.gmra.mrb[0].mxu0 %v934
  %v2069 = vpop.f32.mrb[0].mxu0
  %v2070 = vadd.f32 %v1849, %v2069
  %v2071 = vpop.f32.mrb[0].mxu0
  %v2072 = vpop.f32.mrb[0].mxu0
  %v2073 = vadd.f32 %v1849, %v2072
  %v2074 = vpop.f32.mrb[0].mxu0
  %2075 = vdwg.mxu0
  %2076 = vmatprep.subr.bf16.mxu0 0
  %2077 = vmatpush1.bf16.msra.mxu0 %v1836
  %2078 = vmatprep.subr.bf16.mxu0 0
  %2079 = vmatpush1.bf16.msra.mxu0 %v1837
  %2080 = vmatprep.subr.bf16.mxu0 0
  %2081 = vmatpush1.bf16.msra.mxu0 %v1838
  %2082 = vmatprep.subr.bf16.mxu0 0
  %2083 = vmatpush1.bf16.msra.mxu0 %v1839
  %2084 = vmatprep.subr.bf16.mxu0 0
  %2085 = vmatpush1.bf16.msra.mxu0 %v1840
  %2086 = vmatprep.subr.bf16.mxu0 0
  %2087 = vmatpush1.bf16.msra.mxu0 %v1841
  %2088 = vmatprep.subr.bf16.mxu0 0
  %2089 = vmatpush1.bf16.msra.mxu0 %v1842
  %2090 = vmatprep.subr.bf16.mxu0 0
  %2091 = vmatpush1.bf16.msra.mxu0 %v1843
  %2092 = vmatprep.subr.bf16.mxu0 0
  %2093 = vmatpush1.bf16.msra.mxu0 0
  %2094 = vmatprep.subr.bf16.mxu0 0
  %2095 = vmatpush1.bf16.msra.mxu0 0
  %2096 = vmatprep.subr.bf16.mxu0 0
  %2097 = vmatpush1.bf16.msra.mxu0 0
  %2098 = vmatprep.subr.bf16.mxu0 0
  %2099 = vmatpush1.bf16.msra.mxu0 0
  %2100 = vmatprep.subr.bf16.mxu0 0
  %2101 = vmatpush1.bf16.msra.mxu0 0
  %2102 = vmatprep.subr.bf16.mxu0 0
  %2103 = vmatpush1.bf16.msra.mxu0 0
  %2104 = vmatprep.subr.bf16.mxu0 0
  %2105 = vmatpush1.bf16.msra.mxu0 0
  %2106 = vmatprep.subr.bf16.mxu0 0
  %2107 = vmatpush1.bf16.msra.mxu0 0
  %2108 = vmatprep.mubr.bf16.mxu0 0
  %2109 = vmatmul.mubr.bf16.gmra.mrb[0].mxu0 %v867
  %v2110 = vpop.f32.mrb[0].mxu0
  %v2111 = vadd.f32 %v1886, %v2110
  %v2112 = vpop.f32.mrb[0].mxu0
  %v2113 = vpop.f32.mrb[0].mxu0
  %v2114 = vadd.f32 %v1889, %v2113
  %v2115 = vpop.f32.mrb[0].mxu0
  %2116 = vmatprep.mubr.bf16.mxu0 0
  %2117 = vmatmul.mubr.bf16.gmra.mrb[0].mxu0 %v870
  %v2118 = vpop.f32.mrb[0].mxu0
  %v2119 = vadd.f32 %v1894, %v2118
  %v2120 = vpop.f32.mrb[0].mxu0
  %v2121 = vpop.f32.mrb[0].mxu0
  %v2122 = vadd.f32 %v1897, %v2121
  %v2123 = vpop.f32.mrb[0].mxu0
  %2124 = vmatprep.mubr.bf16.mxu0 0
  %2125 = vmatmul.mubr.bf16.gmra.mrb[0].mxu0 %v873
  %v2126 = vpop.f32.mrb[0].mxu0
  %v2127 = vadd.f32 %v1902, %v2126
  %v2128 = vpop.f32.mrb[0].mxu0
  %v2129 = vpop.f32.mrb[0].mxu0
  %v2130 = vadd.f32 %v1905, %v2129
  %v2131 = vpop.f32.mrb[0].mxu0
  %2132 = vmatprep.mubr.bf16.mxu0 0
  %2133 = vmatmul.mubr.bf16.gmra.mrb[0].mxu0 %v876
  %v2134 = vpop.f32.mrb[0].mxu0
  %v2135 = vadd.f32 %v1910, %v2134
  %v2136 = vpop.f32.mrb[0].mxu0
  %v2137 = vpop.f32.mrb[0].mxu0
  %v2138 = vadd.f32 %v1913, %v2137
  %v2139 = vpop.f32.mrb[0].mxu0
  %2140 = vmatprep.mubr.bf16.mxu0 0
  %2141 = vmatmul.mubr.bf16.gmra.mrb[0].mxu0 %v879
  %v2142 = vpop.f32.mrb[0].mxu0
  %v2143 = vadd.f32 %v1918, %v2142
  %v2144 = vpop.f32.mrb[0].mxu0
  %v2145 = vpop.f32.mrb[0].mxu0
  %v2146 = vadd.f32 %v1921, %v2145
  %v2147 = vpop.f32.mrb[0].mxu0
  %2148 = vmatprep.mubr.bf16.mxu0 0
  %2149 = vmatmul.mubr.bf16.gmra.mrb[0].mxu0 %v882
  %v2150 = vpop.f32.mrb[0].mxu0
  %v2151 = vadd.f32 %v1926, %v2150
  %v2152 = vpop.f32.mrb[0].mxu0
  %v2153 = vpop.f32.mrb[0].mxu0
  %v2154 = vadd.f32 %v1929, %v2153
  %v2155 = vpop.f32.mrb[0].mxu0
  %2156 = vmatprep.mubr.bf16.mxu0 0
  %2157 = vmatmul.mubr.bf16.gmra.mrb[0].mxu0 %v885
  %v2158 = vpop.f32.mrb[0].mxu0
  %v2159 = vadd.f32 %v1934, %v2158
  %v2160 = vpop.f32.mrb[0].mxu0
  %v2161 = vpop.f32.mrb[0].mxu0
  %v2162 = vadd.f32 %v1937, %v2161
  %v2163 = vpop.f32.mrb[0].mxu0
  %2164 = vmatprep.mubr.bf16.mxu0 0
  %2165 = vmatmul.mubr.bf16.gmra.mrb[0].mxu0 %v888
  %v2166 = vpop.f32.mrb[0].mxu0
  %v2167 = vadd.f32 %v1942, %v2166
  %v2168 = vpop.f32.mrb[0].mxu0
  %v2169 = vpop.f32.mrb[0].mxu0
  %v2170 = vadd.f32 %v1945, %v2169
  %v2171 = vpop.f32.mrb[0].mxu0
  %2172 = vmatprep.mubr.bf16.mxu0 0
  %2173 = vmatmul.mubr.bf16.gmra.mrb[0].mxu0 %v891
  %v2174 = vpop.f32.mrb[0].mxu0
  %v2175 = vadd.f32 %v1950, %v2174
  %v2176 = vpop.f32.mrb[0].mxu0
  %v2177 = vpop.f32.mrb[0].mxu0
  %v2178 = vadd.f32 %v1953, %v2177
  %v2179 = vpop.f32.mrb[0].mxu0
  %2180 = vmatprep.mubr.bf16.mxu0 0
  %2181 = vmatmul.mubr.bf16.gmra.mrb[0].mxu0 %v894
  %v2182 = vpop.f32.mrb[0].mxu0
  %v2183 = vadd.f32 %v1958, %v2182
  %v2184 = vpop.f32.mrb[0].mxu0
  %v2185 = vpop.f32.mrb[0].mxu0
  %v2186 = vadd.f32 %v1961, %v2185
  %v2187 = vpop.f32.mrb[0].mxu0
  %2188 = vmatprep.mubr.bf16.mxu0 0
  %2189 = vmatmul.mubr.bf16.gmra.mrb[0].mxu0 %v897
  %v2190 = vpop.f32.mrb[0].mxu0
  %v2191 = vadd.f32 %v1966, %v2190
  %v2192 = vpop.f32.mrb[0].mxu0
  %v2193 = vpop.f32.mrb[0].mxu0
  %v2194 = vadd.f32 %v1969, %v2193
  %v2195 = vpop.f32.mrb[0].mxu0
  %2196 = vmatprep.mubr.bf16.mxu0 0
  %2197 = vmatmul.mubr.bf16.gmra.mrb[0].mxu0 %v900
  %v2198 = vpop.f32.mrb[0].mxu0
  %v2199 = vadd.f32 %v1974, %v2198
  %v2200 = vpop.f32.mrb[0].mxu0
  %v2201 = vpop.f32.mrb[0].mxu0
  %v2202 = vadd.f32 %v1977, %v2201
  %v2203 = vpop.f32.mrb[0].mxu0
  %2204 = vmatprep.mubr.bf16.mxu0 0
  %2205 = vmatmul.mubr.bf16.gmra.mrb[0].mxu0 %v903
  %v2206 = vpop.f32.mrb[0].mxu0
  %v2207 = vadd.f32 %v1982, %v2206
  %v2208 = vpop.f32.mrb[0].mxu0
  %v2209 = vpop.f32.mrb[0].mxu0
  %v2210 = vadd.f32 %v1985, %v2209
  %v2211 = vpop.f32.mrb[0].mxu0
  %2212 = vmatprep.mubr.bf16.mxu0 0
  %2213 = vmatmul.mubr.bf16.gmra.mrb[0].mxu0 %v906
  %v2214 = vpop.f32.mrb[0].mxu0
  %v2215 = vadd.f32 %v1990, %v2214
  %v2216 = vpop.f32.mrb[0].mxu0
  %v2217 = vpop.f32.mrb[0].mxu0
  %v2218 = vadd.f32 %v1993, %v2217
  %v2219 = vpop.f32.mrb[0].mxu0
  %2220 = vmatprep.mubr.bf16.mxu0 0
  %2221 = vmatmul.mubr.bf16.gmra.mrb[0].mxu0 %v909
  %v2222 = vpop.f32.mrb[0].mxu0
  %v2223 = vadd.f32 %v1998, %v2222
  %v2224 = vpop.f32.mrb[0].mxu0
  %v2225 = vpop.f32.mrb[0].mxu0
  %v2226 = vadd.f32 %v2001, %v2225
  %v2227 = vpop.f32.mrb[0].mxu0
  %2228 = vmatprep.mubr.bf16.mxu0 0
  %2229 = vmatmul.mubr.bf16.gmra.mrb[0].mxu0 %v912
  %v2230 = vpop.f32.mrb[0].mxu0
  %v2231 = vadd.f32 %v2006, %v2230
  %v2232 = vpop.f32.mrb[0].mxu0
  %v2233 = vpop.f32.mrb[0].mxu0
  %v2234 = vadd.f32 %v2009, %v2233
  %v2235 = vpop.f32.mrb[0].mxu0
  %2236 = vmatprep.mubr.bf16.mxu0 0
  %2237 = vmatmul.mubr.bf16.gmra.mrb[0].mxu0 %v915
  %v2238 = vpop.f32.mrb[0].mxu0
  %v2239 = vadd.f32 %v2014, %v2238
  %v2240 = vpop.f32.mrb[0].mxu0
  %v2241 = vpop.f32.mrb[0].mxu0
  %v2242 = vadd.f32 %v2017, %v2241
  %v2243 = vpop.f32.mrb[0].mxu0
  %2244 = vmatprep.mubr.bf16.mxu0 0
  %2245 = vmatmul.mubr.bf16.gmra.mrb[0].mxu0 %v918
  %v2246 = vpop.f32.mrb[0].mxu0
  %v2247 = vadd.f32 %v2022, %v2246
  %v2248 = vpop.f32.mrb[0].mxu0
  %v2249 = vpop.f32.mrb[0].mxu0
  %v2250 = vadd.f32 %v2025, %v2249
  %v2251 = vpop.f32.mrb[0].mxu0
  %2252 = vmatprep.mubr.bf16.mxu0 0
  %2253 = vmatmul.mubr.bf16.gmra.mrb[0].mxu0 %v921
  %v2254 = vpop.f32.mrb[0].mxu0
  %v2255 = vadd.f32 %v2030, %v2254
  %v2256 = vpop.f32.mrb[0].mxu0
  %v2257 = vpop.f32.mrb[0].mxu0
  %v2258 = vadd.f32 %v2033, %v2257
  %v2259 = vpop.f32.mrb[0].mxu0
  %2260 = vmatprep.mubr.bf16.mxu0 0
  %2261 = vmatmul.mubr.bf16.gmra.mrb[0].mxu0 %v924
  %v2262 = vpop.f32.mrb[0].mxu0
  %v2263 = vadd.f32 %v2038, %v2262
  %v2264 = vpop.f32.mrb[0].mxu0
  %v2265 = vpop.f32.mrb[0].mxu0
  %v2266 = vadd.f32 %v2041, %v2265
  %v2267 = vpop.f32.mrb[0].mxu0
  %2268 = vmatprep.mubr.bf16.mxu0 0
  %2269 = vmatmul.mubr.bf16.gmra.mrb[0].mxu0 %v927
  %v2270 = vpop.f32.mrb[0].mxu0
  %v2271 = vadd.f32 %v2046, %v2270
  %v2272 = vpop.f32.mrb[0].mxu0
  %v2273 = vpop.f32.mrb[0].mxu0
  %v2274 = vadd.f32 %v2049, %v2273
  %v2275 = vpop.f32.mrb[0].mxu0
  %2276 = vmatprep.mubr.bf16.mxu0 0
  %2277 = vmatmul.mubr.bf16.gmra.mrb[0].mxu0 %v930
  %v2278 = vpop.f32.mrb[0].mxu0
  %v2279 = vadd.f32 %v2054, %v2278
  %v2280 = vpop.f32.mrb[0].mxu0
  %v2281 = vpop.f32.mrb[0].mxu0
  %v2282 = vadd.f32 %v2057, %v2281
  %v2283 = vpop.f32.mrb[0].mxu0
  %2284 = vmatprep.mubr.bf16.mxu0 0
  %2285 = vmatmul.mubr.bf16.gmra.mrb[0].mxu0 %v933
  %v2286 = vpop.f32.mrb[0].mxu0
  %v2287 = vadd.f32 %v2062, %v2286
  %v2288 = vpop.f32.mrb[0].mxu0
  %v2289 = vpop.f32.mrb[0].mxu0
  %v2290 = vadd.f32 %v2065, %v2289
  %v2291 = vpop.f32.mrb[0].mxu0
  %2292 = vmatprep.mubr.bf16.mxu0 0
  %2293 = vmatmul.mubr.bf16.gmra.mrb[0].mxu0 %v936
  %v2294 = vpop.f32.mrb[0].mxu0
  %v2295 = vadd.f32 %v2070, %v2294
  %v2296 = vpop.f32.mrb[0].mxu0
  %v2297 = vpop.f32.mrb[0].mxu0
  %v2298 = vadd.f32 %v2073, %v2297
  %v2299 = vpop.f32.mrb[0].mxu0
  %2300 = vdwg.mxu0
  %v2301 = vlaneseq
  %v2302 = vand.u32 %v2301, 127
  %vm2303 = vcmp.lt.s32.totalorder %v2302, 8
  %v2304 = vsel %vm2303, %v2111, -1e+30
  %v2305 = vsel %vm2303, %v2114, -1e+30
  %v2306 = vsel %vm2303, %v2119, -1e+30
  %v2307 = vsel %vm2303, %v2122, -1e+30
  %v2308 = vsel %vm2303, %v2127, -1e+30
  %v2309 = vsel %vm2303, %v2130, -1e+30
  %v2310 = vsel %vm2303, %v2135, -1e+30
  %v2311 = vsel %vm2303, %v2138, -1e+30
  %v2312 = vsel %vm2303, %v2143, -1e+30
  %v2313 = vsel %vm2303, %v2146, -1e+30
  %v2314 = vsel %vm2303, %v2151, -1e+30
  %v2315 = vsel %vm2303, %v2154, -1e+30
  %v2316 = vsel %vm2303, %v2159, -1e+30
  %v2317 = vsel %vm2303, %v2162, -1e+30
  %v2318 = vsel %vm2303, %v2167, -1e+30
  %v2319 = vsel %vm2303, %v2170, -1e+30
  %v2320 = vsel %vm2303, %v2175, -1e+30
  %v2321 = vsel %vm2303, %v2178, -1e+30
  %v2322 = vsel %vm2303, %v2183, -1e+30
  %v2323 = vsel %vm2303, %v2186, -1e+30
  %v2324 = vsel %vm2303, %v2191, -1e+30
  %v2325 = vsel %vm2303, %v2194, -1e+30
  %v2326 = vsel %vm2303, %v2199, -1e+30
  %v2327 = vsel %vm2303, %v2202, -1e+30
  %v2328 = vsel %vm2303, %v2207, -1e+30
  %v2329 = vsel %vm2303, %v2210, -1e+30
  %v2330 = vsel %vm2303, %v2215, -1e+30
  %v2331 = vsel %vm2303, %v2218, -1e+30
  %v2332 = vsel %vm2303, %v2223, -1e+30
  %v2333 = vsel %vm2303, %v2226, -1e+30
  %v2334 = vsel %vm2303, %v2231, -1e+30
  %v2335 = vsel %vm2303, %v2234, -1e+30
  %v2336 = vsel %vm2303, %v2239, -1e+30
  %v2337 = vsel %vm2303, %v2242, -1e+30
  %v2338 = vsel %vm2303, %v2247, -1e+30
  %v2339 = vsel %vm2303, %v2250, -1e+30
  %v2340 = vsel %vm2303, %v2255, -1e+30
  %v2341 = vsel %vm2303, %v2258, -1e+30
  %v2342 = vsel %vm2303, %v2263, -1e+30
  %v2343 = vsel %vm2303, %v2266, -1e+30
  %v2344 = vsel %vm2303, %v2271, -1e+30
  %v2345 = vsel %vm2303, %v2274, -1e+30
  %v2346 = vsel %vm2303, %v2279, -1e+30
  %v2347 = vsel %vm2303, %v2282, -1e+30
  %v2348 = vsel %vm2303, %v2287, -1e+30
  %v2349 = vsel %vm2303, %v2290, -1e+30
  %v2350 = vsel %vm2303, %v2295, -1e+30
  %v2351 = vsel %vm2303, %v2298, -1e+30
  %2352 = vmax.xlane.f32.xlu0 %v2304
  %v2353 = vpop.xlane.xlu0 %2352
  %2354 = vmax.xlane.f32.xlu0 %v2305
  %v2355 = vpop.xlane.xlu0 %2354
  %2356 = vmax.xlane.f32.xlu0 %v2306
  %v2357 = vpop.xlane.xlu0 %2356
  %2358 = vmax.xlane.f32.xlu0 %v2307
  %v2359 = vpop.xlane.xlu0 %2358
  %2360 = vmax.xlane.f32.xlu0 %v2308
  %v2361 = vpop.xlane.xlu0 %2360
  %2362 = vmax.xlane.f32.xlu0 %v2309
  %v2363 = vpop.xlane.xlu0 %2362
  %2364 = vmax.xlane.f32.xlu0 %v2310
  %v2365 = vpop.xlane.xlu0 %2364
  %2366 = vmax.xlane.f32.xlu0 %v2311
  %v2367 = vpop.xlane.xlu0 %2366
  %2368 = vmax.xlane.f32.xlu0 %v2312
  %v2369 = vpop.xlane.xlu0 %2368
  %2370 = vmax.xlane.f32.xlu0 %v2313
  %v2371 = vpop.xlane.xlu0 %2370
  %2372 = vmax.xlane.f32.xlu0 %v2314
  %v2373 = vpop.xlane.xlu0 %2372
  %2374 = vmax.xlane.f32.xlu0 %v2315
  %v2375 = vpop.xlane.xlu0 %2374
  %2376 = vmax.xlane.f32.xlu0 %v2316
  %v2377 = vpop.xlane.xlu0 %2376
  %2378 = vmax.xlane.f32.xlu0 %v2317
  %v2379 = vpop.xlane.xlu0 %2378
  %2380 = vmax.xlane.f32.xlu0 %v2318
  %v2381 = vpop.xlane.xlu0 %2380
  %2382 = vmax.xlane.f32.xlu0 %v2319
  %v2383 = vpop.xlane.xlu0 %2382
  %2384 = vmax.xlane.f32.xlu0 %v2320
  %v2385 = vpop.xlane.xlu0 %2384
  %2386 = vmax.xlane.f32.xlu0 %v2321
  %v2387 = vpop.xlane.xlu0 %2386
  %2388 = vmax.xlane.f32.xlu0 %v2322
  %v2389 = vpop.xlane.xlu0 %2388
  %2390 = vmax.xlane.f32.xlu0 %v2323
  %v2391 = vpop.xlane.xlu0 %2390
  %2392 = vmax.xlane.f32.xlu0 %v2324
  %v2393 = vpop.xlane.xlu0 %2392
  %2394 = vmax.xlane.f32.xlu0 %v2325
  %v2395 = vpop.xlane.xlu0 %2394
  %2396 = vmax.xlane.f32.xlu0 %v2326
  %v2397 = vpop.xlane.xlu0 %2396
  %2398 = vmax.xlane.f32.xlu0 %v2327
  %v2399 = vpop.xlane.xlu0 %2398
  %2400 = vmax.xlane.f32.xlu0 %v2328
  %v2401 = vpop.xlane.xlu0 %2400
  %2402 = vmax.xlane.f32.xlu0 %v2329
  %v2403 = vpop.xlane.xlu0 %2402
  %2404 = vmax.xlane.f32.xlu0 %v2330
  %v2405 = vpop.xlane.xlu0 %2404
  %2406 = vmax.xlane.f32.xlu0 %v2331
  %v2407 = vpop.xlane.xlu0 %2406
  %2408 = vmax.xlane.f32.xlu0 %v2332
  %v2409 = vpop.xlane.xlu0 %2408
  %2410 = vmax.xlane.f32.xlu0 %v2333
  %v2411 = vpop.xlane.xlu0 %2410
  %2412 = vmax.xlane.f32.xlu0 %v2334
  %v2413 = vpop.xlane.xlu0 %2412
  %2414 = vmax.xlane.f32.xlu0 %v2335
  %v2415 = vpop.xlane.xlu0 %2414
  %2416 = vmax.xlane.f32.xlu0 %v2336
  %v2417 = vpop.xlane.xlu0 %2416
  %2418 = vmax.xlane.f32.xlu0 %v2337
  %v2419 = vpop.xlane.xlu0 %2418
  %2420 = vmax.xlane.f32.xlu0 %v2338
  %v2421 = vpop.xlane.xlu0 %2420
  %2422 = vmax.xlane.f32.xlu0 %v2339
  %v2423 = vpop.xlane.xlu0 %2422
  %2424 = vmax.xlane.f32.xlu0 %v2340
  %v2425 = vpop.xlane.xlu0 %2424
  %2426 = vmax.xlane.f32.xlu0 %v2341
  %v2427 = vpop.xlane.xlu0 %2426
  %2428 = vmax.xlane.f32.xlu0 %v2342
  %v2429 = vpop.xlane.xlu0 %2428
  %2430 = vmax.xlane.f32.xlu0 %v2343
  %v2431 = vpop.xlane.xlu0 %2430
  %2432 = vmax.xlane.f32.xlu0 %v2344
  %v2433 = vpop.xlane.xlu0 %2432
  %2434 = vmax.xlane.f32.xlu0 %v2345
  %v2435 = vpop.xlane.xlu0 %2434
  %2436 = vmax.xlane.f32.xlu0 %v2346
  %v2437 = vpop.xlane.xlu0 %2436
  %2438 = vmax.xlane.f32.xlu0 %v2347
  %v2439 = vpop.xlane.xlu0 %2438
  %2440 = vmax.xlane.f32.xlu0 %v2348
  %v2441 = vpop.xlane.xlu0 %2440
  %2442 = vmax.xlane.f32.xlu0 %v2349
  %v2443 = vpop.xlane.xlu0 %2442
  %2444 = vmax.xlane.f32.xlu0 %v2350
  %v2445 = vpop.xlane.xlu0 %2444
  %2446 = vmax.xlane.f32.xlu0 %v2351
  %v2447 = vpop.xlane.xlu0 %2446
  %v2448 = vsub.f32 %v2304, %v2353
  %v2449 = vsub.f32 %v2305, %v2355
  %v2450 = vsub.f32 %v2306, %v2357
  %v2451 = vsub.f32 %v2307, %v2359
  %v2452 = vsub.f32 %v2308, %v2361
  %v2453 = vsub.f32 %v2309, %v2363
  %v2454 = vsub.f32 %v2310, %v2365
  %v2455 = vsub.f32 %v2311, %v2367
  %v2456 = vsub.f32 %v2312, %v2369
  %v2457 = vsub.f32 %v2313, %v2371
  %v2458 = vsub.f32 %v2314, %v2373
  %v2459 = vsub.f32 %v2315, %v2375
  %v2460 = vsub.f32 %v2316, %v2377
  %v2461 = vsub.f32 %v2317, %v2379
  %v2462 = vsub.f32 %v2318, %v2381
  %v2463 = vsub.f32 %v2319, %v2383
  %v2464 = vsub.f32 %v2320, %v2385
  %v2465 = vsub.f32 %v2321, %v2387
  %v2466 = vsub.f32 %v2322, %v2389
  %v2467 = vsub.f32 %v2323, %v2391
  %v2468 = vsub.f32 %v2324, %v2393
  %v2469 = vsub.f32 %v2325, %v2395
  %v2470 = vsub.f32 %v2326, %v2397
  %v2471 = vsub.f32 %v2327, %v2399
  %v2472 = vsub.f32 %v2328, %v2401
  %v2473 = vsub.f32 %v2329, %v2403
  %v2474 = vsub.f32 %v2330, %v2405
  %v2475 = vsub.f32 %v2331, %v2407
  %v2476 = vsub.f32 %v2332, %v2409
  %v2477 = vsub.f32 %v2333, %v2411
  %v2478 = vsub.f32 %v2334, %v2413
  %v2479 = vsub.f32 %v2335, %v2415
  %v2480 = vsub.f32 %v2336, %v2417
  %v2481 = vsub.f32 %v2337, %v2419
  %v2482 = vsub.f32 %v2338, %v2421
  %v2483 = vsub.f32 %v2339, %v2423
  %v2484 = vsub.f32 %v2340, %v2425
  %v2485 = vsub.f32 %v2341, %v2427
  %v2486 = vsub.f32 %v2342, %v2429
  %v2487 = vsub.f32 %v2343, %v2431
  %v2488 = vsub.f32 %v2344, %v2433
  %v2489 = vsub.f32 %v2345, %v2435
  %v2490 = vsub.f32 %v2346, %v2437
  %v2491 = vsub.f32 %v2347, %v2439
  %v2492 = vsub.f32 %v2348, %v2441
  %v2493 = vsub.f32 %v2349, %v2443
  %v2494 = vsub.f32 %v2350, %v2445
  %v2495 = vsub.f32 %v2351, %v2447
  %v2496 = vmul.f32 %v2448, 1.442695
  %v2497 = vpow.pop %v2496
  %v2498 = vmul.f32 %v2449, 1.442695
  %v2499 = vpow.pop %v2498
  %v2500 = vmul.f32 %v2450, 1.442695
  %v2501 = vpow.pop %v2500
  %v2502 = vmul.f32 %v2451, 1.442695
  %v2503 = vpow.pop %v2502
  %v2504 = vmul.f32 %v2452, 1.442695
  %v2505 = vpow.pop %v2504
  %v2506 = vmul.f32 %v2453, 1.442695
  %v2507 = vpow.pop %v2506
  %v2508 = vmul.f32 %v2454, 1.442695
  %v2509 = vpow.pop %v2508
  %v2510 = vmul.f32 %v2455, 1.442695
  %v2511 = vpow.pop %v2510
  %v2512 = vmul.f32 %v2456, 1.442695
  %v2513 = vpow.pop %v2512
  %v2514 = vmul.f32 %v2457, 1.442695
  %v2515 = vpow.pop %v2514
  %v2516 = vmul.f32 %v2458, 1.442695
  %v2517 = vpow.pop %v2516
  %v2518 = vmul.f32 %v2459, 1.442695
  %v2519 = vpow.pop %v2518
  %v2520 = vmul.f32 %v2460, 1.442695
  %v2521 = vpow.pop %v2520
  %v2522 = vmul.f32 %v2461, 1.442695
  %v2523 = vpow.pop %v2522
  %v2524 = vmul.f32 %v2462, 1.442695
  %v2525 = vpow.pop %v2524
  %v2526 = vmul.f32 %v2463, 1.442695
  %v2527 = vpow.pop %v2526
  %v2528 = vmul.f32 %v2464, 1.442695
  %v2529 = vpow.pop %v2528
  %v2530 = vmul.f32 %v2465, 1.442695
  %v2531 = vpow.pop %v2530
  %v2532 = vmul.f32 %v2466, 1.442695
  %v2533 = vpow.pop %v2532
  %v2534 = vmul.f32 %v2467, 1.442695
  %v2535 = vpow.pop %v2534
  %v2536 = vmul.f32 %v2468, 1.442695
  %v2537 = vpow.pop %v2536
  %v2538 = vmul.f32 %v2469, 1.442695
  %v2539 = vpow.pop %v2538
  %v2540 = vmul.f32 %v2470, 1.442695
  %v2541 = vpow.pop %v2540
  %v2542 = vmul.f32 %v2471, 1.442695
  %v2543 = vpow.pop %v2542
  %v2544 = vmul.f32 %v2472, 1.442695
  %v2545 = vpow.pop %v2544
  %v2546 = vmul.f32 %v2473, 1.442695
  %v2547 = vpow.pop %v2546
  %v2548 = vmul.f32 %v2474, 1.442695
  %v2549 = vpow.pop %v2548
  %v2550 = vmul.f32 %v2475, 1.442695
  %v2551 = vpow.pop %v2550
  %v2552 = vmul.f32 %v2476, 1.442695
  %v2553 = vpow.pop %v2552
  %v2554 = vmul.f32 %v2477, 1.442695
  %v2555 = vpow.pop %v2554
  %v2556 = vmul.f32 %v2478, 1.442695
  %v2557 = vpow.pop %v2556
  %v2558 = vmul.f32 %v2479, 1.442695
  %v2559 = vpow.pop %v2558
  %v2560 = vmul.f32 %v2480, 1.442695
  %v2561 = vpow.pop %v2560
  %v2562 = vmul.f32 %v2481, 1.442695
  %v2563 = vpow.pop %v2562
  %v2564 = vmul.f32 %v2482, 1.442695
  %v2565 = vpow.pop %v2564
  %v2566 = vmul.f32 %v2483, 1.442695
  %v2567 = vpow.pop %v2566
  %v2568 = vmul.f32 %v2484, 1.442695
  %v2569 = vpow.pop %v2568
  %v2570 = vmul.f32 %v2485, 1.442695
  %v2571 = vpow.pop %v2570
  %v2572 = vmul.f32 %v2486, 1.442695
  %v2573 = vpow.pop %v2572
  %v2574 = vmul.f32 %v2487, 1.442695
  %v2575 = vpow.pop %v2574
  %v2576 = vmul.f32 %v2488, 1.442695
  %v2577 = vpow.pop %v2576
  %v2578 = vmul.f32 %v2489, 1.442695
  %v2579 = vpow.pop %v2578
  %v2580 = vmul.f32 %v2490, 1.442695
  %v2581 = vpow.pop %v2580
  %v2582 = vmul.f32 %v2491, 1.442695
  %v2583 = vpow.pop %v2582
  %v2584 = vmul.f32 %v2492, 1.442695
  %v2585 = vpow.pop %v2584
  %v2586 = vmul.f32 %v2493, 1.442695
  %v2587 = vpow.pop %v2586
  %v2588 = vmul.f32 %v2494, 1.442695
  %v2589 = vpow.pop %v2588
  %v2590 = vmul.f32 %v2495, 1.442695
  %v2591 = vpow.pop %v2590
  %2592 = vadd.xlane.f32.xlu0 %v2497
  %v2593 = vpop.xlane.xlu0 %2592
  %2594 = vadd.xlane.f32.xlu0 %v2499
  %v2595 = vpop.xlane.xlu0 %2594
  %2596 = vadd.xlane.f32.xlu0 %v2501
  %v2597 = vpop.xlane.xlu0 %2596
  %2598 = vadd.xlane.f32.xlu0 %v2503
  %v2599 = vpop.xlane.xlu0 %2598
  %2600 = vadd.xlane.f32.xlu0 %v2505
  %v2601 = vpop.xlane.xlu0 %2600
  %2602 = vadd.xlane.f32.xlu0 %v2507
  %v2603 = vpop.xlane.xlu0 %2602
  %2604 = vadd.xlane.f32.xlu0 %v2509
  %v2605 = vpop.xlane.xlu0 %2604
  %2606 = vadd.xlane.f32.xlu0 %v2511
  %v2607 = vpop.xlane.xlu0 %2606
  %2608 = vadd.xlane.f32.xlu0 %v2513
  %v2609 = vpop.xlane.xlu0 %2608
  %2610 = vadd.xlane.f32.xlu0 %v2515
  %v2611 = vpop.xlane.xlu0 %2610
  %2612 = vadd.xlane.f32.xlu0 %v2517
  %v2613 = vpop.xlane.xlu0 %2612
  %2614 = vadd.xlane.f32.xlu0 %v2519
  %v2615 = vpop.xlane.xlu0 %2614
  %2616 = vadd.xlane.f32.xlu0 %v2521
  %v2617 = vpop.xlane.xlu0 %2616
  %2618 = vadd.xlane.f32.xlu0 %v2523
  %v2619 = vpop.xlane.xlu0 %2618
  %2620 = vadd.xlane.f32.xlu0 %v2525
  %v2621 = vpop.xlane.xlu0 %2620
  %2622 = vadd.xlane.f32.xlu0 %v2527
  %v2623 = vpop.xlane.xlu0 %2622
  %2624 = vadd.xlane.f32.xlu0 %v2529
  %v2625 = vpop.xlane.xlu0 %2624
  %2626 = vadd.xlane.f32.xlu0 %v2531
  %v2627 = vpop.xlane.xlu0 %2626
  %2628 = vadd.xlane.f32.xlu0 %v2533
  %v2629 = vpop.xlane.xlu0 %2628
  %2630 = vadd.xlane.f32.xlu0 %v2535
  %v2631 = vpop.xlane.xlu0 %2630
  %2632 = vadd.xlane.f32.xlu0 %v2537
  %v2633 = vpop.xlane.xlu0 %2632
  %2634 = vadd.xlane.f32.xlu0 %v2539
  %v2635 = vpop.xlane.xlu0 %2634
  %2636 = vadd.xlane.f32.xlu0 %v2541
  %v2637 = vpop.xlane.xlu0 %2636
  %2638 = vadd.xlane.f32.xlu0 %v2543
  %v2639 = vpop.xlane.xlu0 %2638
  %2640 = vadd.xlane.f32.xlu0 %v2545
  %v2641 = vpop.xlane.xlu0 %2640
  %2642 = vadd.xlane.f32.xlu0 %v2547
  %v2643 = vpop.xlane.xlu0 %2642
  %2644 = vadd.xlane.f32.xlu0 %v2549
  %v2645 = vpop.xlane.xlu0 %2644
  %2646 = vadd.xlane.f32.xlu0 %v2551
  %v2647 = vpop.xlane.xlu0 %2646
  %2648 = vadd.xlane.f32.xlu0 %v2553
  %v2649 = vpop.xlane.xlu0 %2648
  %2650 = vadd.xlane.f32.xlu0 %v2555
  %v2651 = vpop.xlane.xlu0 %2650
  %2652 = vadd.xlane.f32.xlu0 %v2557
  %v2653 = vpop.xlane.xlu0 %2652
  %2654 = vadd.xlane.f32.xlu0 %v2559
  %v2655 = vpop.xlane.xlu0 %2654
  %2656 = vadd.xlane.f32.xlu0 %v2561
  %v2657 = vpop.xlane.xlu0 %2656
  %2658 = vadd.xlane.f32.xlu0 %v2563
  %v2659 = vpop.xlane.xlu0 %2658
  %2660 = vadd.xlane.f32.xlu0 %v2565
  %v2661 = vpop.xlane.xlu0 %2660
  %2662 = vadd.xlane.f32.xlu0 %v2567
  %v2663 = vpop.xlane.xlu0 %2662
  %2664 = vadd.xlane.f32.xlu0 %v2569
  %v2665 = vpop.xlane.xlu0 %2664
  %2666 = vadd.xlane.f32.xlu0 %v2571
  %v2667 = vpop.xlane.xlu0 %2666
  %2668 = vadd.xlane.f32.xlu0 %v2573
  %v2669 = vpop.xlane.xlu0 %2668
  %2670 = vadd.xlane.f32.xlu0 %v2575
  %v2671 = vpop.xlane.xlu0 %2670
  %2672 = vadd.xlane.f32.xlu0 %v2577
  %v2673 = vpop.xlane.xlu0 %2672
  %2674 = vadd.xlane.f32.xlu0 %v2579
  %v2675 = vpop.xlane.xlu0 %2674
  %2676 = vadd.xlane.f32.xlu0 %v2581
  %v2677 = vpop.xlane.xlu0 %2676
  %2678 = vadd.xlane.f32.xlu0 %v2583
  %v2679 = vpop.xlane.xlu0 %2678
  %2680 = vadd.xlane.f32.xlu0 %v2585
  %v2681 = vpop.xlane.xlu0 %2680
  %2682 = vadd.xlane.f32.xlu0 %v2587
  %v2683 = vpop.xlane.xlu0 %2682
  %2684 = vadd.xlane.f32.xlu0 %v2589
  %v2685 = vpop.xlane.xlu0 %2684
  %2686 = vadd.xlane.f32.xlu0 %v2591
  %v2687 = vpop.xlane.xlu0 %2686
  %v2688 = vlog2.pop %v2593
  %v2689 = vmul.f32 %v2688, 0.6931472
  %v2690 = vlog2.pop %v2595
  %v2691 = vmul.f32 %v2690, 0.6931472
  %v2692 = vlog2.pop %v2597
  %v2693 = vmul.f32 %v2692, 0.6931472
  %v2694 = vlog2.pop %v2599
  %v2695 = vmul.f32 %v2694, 0.6931472
  %v2696 = vlog2.pop %v2601
  %v2697 = vmul.f32 %v2696, 0.6931472
  %v2698 = vlog2.pop %v2603
  %v2699 = vmul.f32 %v2698, 0.6931472
  %v2700 = vlog2.pop %v2605
  %v2701 = vmul.f32 %v2700, 0.6931472
  %v2702 = vlog2.pop %v2607
  %v2703 = vmul.f32 %v2702, 0.6931472
  %v2704 = vlog2.pop %v2609
  %v2705 = vmul.f32 %v2704, 0.6931472
  %v2706 = vlog2.pop %v2611
  %v2707 = vmul.f32 %v2706, 0.6931472
  %v2708 = vlog2.pop %v2613
  %v2709 = vmul.f32 %v2708, 0.6931472
  %v2710 = vlog2.pop %v2615
  %v2711 = vmul.f32 %v2710, 0.6931472
  %v2712 = vlog2.pop %v2617
  %v2713 = vmul.f32 %v2712, 0.6931472
  %v2714 = vlog2.pop %v2619
  %v2715 = vmul.f32 %v2714, 0.6931472
  %v2716 = vlog2.pop %v2621
  %v2717 = vmul.f32 %v2716, 0.6931472
  %v2718 = vlog2.pop %v2623
  %v2719 = vmul.f32 %v2718, 0.6931472
  %v2720 = vlog2.pop %v2625
  %v2721 = vmul.f32 %v2720, 0.6931472
  %v2722 = vlog2.pop %v2627
  %v2723 = vmul.f32 %v2722, 0.6931472
  %v2724 = vlog2.pop %v2629
  %v2725 = vmul.f32 %v2724, 0.6931472
  %v2726 = vlog2.pop %v2631
  %v2727 = vmul.f32 %v2726, 0.6931472
  %v2728 = vlog2.pop %v2633
  %v2729 = vmul.f32 %v2728, 0.6931472
  %v2730 = vlog2.pop %v2635
  %v2731 = vmul.f32 %v2730, 0.6931472
  %v2732 = vlog2.pop %v2637
  %v2733 = vmul.f32 %v2732, 0.6931472
  %v2734 = vlog2.pop %v2639
  %v2735 = vmul.f32 %v2734, 0.6931472
  %v2736 = vlog2.pop %v2641
  %v2737 = vmul.f32 %v2736, 0.6931472
  %v2738 = vlog2.pop %v2643
  %v2739 = vmul.f32 %v2738, 0.6931472
  %v2740 = vlog2.pop %v2645
  %v2741 = vmul.f32 %v2740, 0.6931472
  %v2742 = vlog2.pop %v2647
  %v2743 = vmul.f32 %v2742, 0.6931472
  %v2744 = vlog2.pop %v2649
  %v2745 = vmul.f32 %v2744, 0.6931472
  %v2746 = vlog2.pop %v2651
  %v2747 = vmul.f32 %v2746, 0.6931472
  %v2748 = vlog2.pop %v2653
  %v2749 = vmul.f32 %v2748, 0.6931472
  %v2750 = vlog2.pop %v2655
  %v2751 = vmul.f32 %v2750, 0.6931472
  %v2752 = vlog2.pop %v2657
  %v2753 = vmul.f32 %v2752, 0.6931472
  %v2754 = vlog2.pop %v2659
  %v2755 = vmul.f32 %v2754, 0.6931472
  %v2756 = vlog2.pop %v2661
  %v2757 = vmul.f32 %v2756, 0.6931472
  %v2758 = vlog2.pop %v2663
  %v2759 = vmul.f32 %v2758, 0.6931472
  %v2760 = vlog2.pop %v2665
  %v2761 = vmul.f32 %v2760, 0.6931472
  %v2762 = vlog2.pop %v2667
  %v2763 = vmul.f32 %v2762, 0.6931472
  %v2764 = vlog2.pop %v2669
  %v2765 = vmul.f32 %v2764, 0.6931472
  %v2766 = vlog2.pop %v2671
  %v2767 = vmul.f32 %v2766, 0.6931472
  %v2768 = vlog2.pop %v2673
  %v2769 = vmul.f32 %v2768, 0.6931472
  %v2770 = vlog2.pop %v2675
  %v2771 = vmul.f32 %v2770, 0.6931472
  %v2772 = vlog2.pop %v2677
  %v2773 = vmul.f32 %v2772, 0.6931472
  %v2774 = vlog2.pop %v2679
  %v2775 = vmul.f32 %v2774, 0.6931472
  %v2776 = vlog2.pop %v2681
  %v2777 = vmul.f32 %v2776, 0.6931472
  %v2778 = vlog2.pop %v2683
  %v2779 = vmul.f32 %v2778, 0.6931472
  %v2780 = vlog2.pop %v2685
  %v2781 = vmul.f32 %v2780, 0.6931472
  %v2782 = vlog2.pop %v2687
  %v2783 = vmul.f32 %v2782, 0.6931472
  %v2784 = vsub.f32 %v2448, %v2689
  %v2785 = vsub.f32 %v2449, %v2691
  %v2786 = vsub.f32 %v2450, %v2693
  %v2787 = vsub.f32 %v2451, %v2695
  %v2788 = vsub.f32 %v2452, %v2697
  %v2789 = vsub.f32 %v2453, %v2699
  %v2790 = vsub.f32 %v2454, %v2701
  %v2791 = vsub.f32 %v2455, %v2703
  %v2792 = vsub.f32 %v2456, %v2705
  %v2793 = vsub.f32 %v2457, %v2707
  %v2794 = vsub.f32 %v2458, %v2709
  %v2795 = vsub.f32 %v2459, %v2711
  %v2796 = vsub.f32 %v2460, %v2713
  %v2797 = vsub.f32 %v2461, %v2715
  %v2798 = vsub.f32 %v2462, %v2717
  %v2799 = vsub.f32 %v2463, %v2719
  %v2800 = vsub.f32 %v2464, %v2721
  %v2801 = vsub.f32 %v2465, %v2723
  %v2802 = vsub.f32 %v2466, %v2725
  %v2803 = vsub.f32 %v2467, %v2727
  %v2804 = vsub.f32 %v2468, %v2729
  %v2805 = vsub.f32 %v2469, %v2731
  %v2806 = vsub.f32 %v2470, %v2733
  %v2807 = vsub.f32 %v2471, %v2735
  %v2808 = vsub.f32 %v2472, %v2737
  %v2809 = vsub.f32 %v2473, %v2739
  %v2810 = vsub.f32 %v2474, %v2741
  %v2811 = vsub.f32 %v2475, %v2743
  %v2812 = vsub.f32 %v2476, %v2745
  %v2813 = vsub.f32 %v2477, %v2747
  %v2814 = vsub.f32 %v2478, %v2749
  %v2815 = vsub.f32 %v2479, %v2751
  %v2816 = vsub.f32 %v2480, %v2753
  %v2817 = vsub.f32 %v2481, %v2755
  %v2818 = vsub.f32 %v2482, %v2757
  %v2819 = vsub.f32 %v2483, %v2759
  %v2820 = vsub.f32 %v2484, %v2761
  %v2821 = vsub.f32 %v2485, %v2763
  %v2822 = vsub.f32 %v2486, %v2765
  %v2823 = vsub.f32 %v2487, %v2767
  %v2824 = vsub.f32 %v2488, %v2769
  %v2825 = vsub.f32 %v2489, %v2771
  %v2826 = vsub.f32 %v2490, %v2773
  %v2827 = vsub.f32 %v2491, %v2775
  %v2828 = vsub.f32 %v2492, %v2777
  %v2829 = vsub.f32 %v2493, %v2779
  %v2830 = vsub.f32 %v2494, %v2781
  %v2831 = vsub.f32 %v2495, %v2783
  %2832 = vst [vmem:[%s6] sm:$0xff] %v2784
  %2833 = vst [vmem:[%s6 + $0x8] sm:$0xff] %v2785
  %2834 = vst [vmem:[%s6 + $0x10] sm:$0xff] %v2786
  %2835 = vst [vmem:[%s6 + $0x18] sm:$0xff] %v2787
  %2836 = vst [vmem:[%s6 + $0x20] sm:$0xff] %v2788
  %2837 = vst [vmem:[%s6 + $0x28] sm:$0xff] %v2789
  %2838 = vst [vmem:[%s6 + $0x30] sm:$0xff] %v2790
  %2839 = vst [vmem:[%s6 + $0x38] sm:$0xff] %v2791
  %2840 = vst [vmem:[%s6 + $0x40] sm:$0xff] %v2792
  %2841 = vst [vmem:[%s6 + $0x48] sm:$0xff] %v2793
  %2842 = vst [vmem:[%s6 + $0x50] sm:$0xff] %v2794
  %2843 = vst [vmem:[%s6 + $0x58] sm:$0xff] %v2795
  %2844 = vst [vmem:[%s6 + $0x60] sm:$0xff] %v2796
  %2845 = vst [vmem:[%s6 + $0x68] sm:$0xff] %v2797
  %2846 = vst [vmem:[%s6 + $0x70] sm:$0xff] %v2798
  %2847 = vst [vmem:[%s6 + $0x78] sm:$0xff] %v2799
  %2848 = vst [vmem:[%s6 + $0x80] sm:$0xff] %v2800
  %2849 = vst [vmem:[%s6 + $0x88] sm:$0xff] %v2801
  %2850 = vst [vmem:[%s6 + $0x90] sm:$0xff] %v2802
  %2851 = vst [vmem:[%s6 + $0x98] sm:$0xff] %v2803
  %2852 = vst [vmem:[%s6 + $0xa0] sm:$0xff] %v2804
  %2853 = vst [vmem:[%s6 + $0xa8] sm:$0xff] %v2805
  %2854 = vst [vmem:[%s6 + $0xb0] sm:$0xff] %v2806
  %2855 = vst [vmem:[%s6 + $0xb8] sm:$0xff] %v2807
  %2856 = vst [vmem:[%s6 + $0xc0] sm:$0xff] %v2808
  %2857 = vst [vmem:[%s6 + $0xc8] sm:$0xff] %v2809
  %2858 = vst [vmem:[%s6 + $0xd0] sm:$0xff] %v2810
  %2859 = vst [vmem:[%s6 + $0xd8] sm:$0xff] %v2811
  %2860 = vst [vmem:[%s6 + $0xe0] sm:$0xff] %v2812
  %2861 = vst [vmem:[%s6 + $0xe8] sm:$0xff] %v2813
  %2862 = vst [vmem:[%s6 + $0xf0] sm:$0xff] %v2814
  %2863 = vst [vmem:[%s6 + $0xf8] sm:$0xff] %v2815
  %2864 = vst [vmem:[%s6 + $0x100] sm:$0xff] %v2816
  %2865 = vst [vmem:[%s6 + $0x108] sm:$0xff] %v2817
  %2866 = vst [vmem:[%s6 + $0x110] sm:$0xff] %v2818
  %2867 = vst [vmem:[%s6 + $0x118] sm:$0xff] %v2819
  %2868 = vst [vmem:[%s6 + $0x120] sm:$0xff] %v2820
  %2869 = vst [vmem:[%s6 + $0x128] sm:$0xff] %v2821
  %2870 = vst [vmem:[%s6 + $0x130] sm:$0xff] %v2822
  %2871 = vst [vmem:[%s6 + $0x138] sm:$0xff] %v2823
  %2872 = vst [vmem:[%s6 + $0x140] sm:$0xff] %v2824
  %2873 = vst [vmem:[%s6 + $0x148] sm:$0xff] %v2825
  %2874 = vst [vmem:[%s6 + $0x150] sm:$0xff] %v2826
  %2875 = vst [vmem:[%s6 + $0x158] sm:$0xff] %v2827
  %2876 = vst [vmem:[%s6 + $0x160] sm:$0xff] %v2828
  %2877 = vst [vmem:[%s6 + $0x168] sm:$0xff] %v2829
  %2878 = vst [vmem:[%s6 + $0x170] sm:$0xff] %v2830
  %2879 = vst [vmem:[%s6 + $0x178] sm:$0xff] %v2831
  // Predicated region
  $region26: #{digcn_forward.1} parent=0 // pred_check
    _
  $region27: #{digcn_forward.1} parent=0 // pred_check_branch
    %2881 = sbr.rel (0) target = $region29
  $region28: #{digcn_forward.1} parent=0 // pred_region
    _
  $region29: #{digcn_forward.1} parent=0 // pred_fallthru
    _
  // Predicated region
  $region30: #{digcn_forward.1} parent=0 // pred_check
    _
  $region31: #{digcn_forward.1} parent=0 // pred_check_branch
    %2883 = sbr.rel (0) target = $region33
  $region32: #{digcn_forward.1} parent=0 // pred_region
    _
  $region33: #{digcn_forward.1} parent=0 // pred_fallthru
    _

</llo_original>
